<compile_context>
chip_gen: v5e
topology: v5e:2x2
jax: 0.10.0
libtpu: 0.0.40
codegen_flags: <defaults>
</compile_context>

<pallas_src>
import functools

import jax
import jax.numpy as jnp
from jax import lax
from jax.experimental import pallas as pl
from jax.experimental.pallas import tpu as pltpu


def _upblock_kernel(x_ref, w1_ref, w2_ref, s1_ref, b1_ref, s2_ref, b2_ref, o_ref,
                    *, th, H, is_last):
    """One (batch element, H tile) per grid step; everything lane-packed.

    x_ref  : (th+4, (W+2)*Cin) bf16   image rows [h*th-2, h*th+th+2) of the column-
                                      padded input (zero rows outside the image).
    w1_ref : (3, (W+2)*Cin, W*Cin) bf16  conv1 block-Toeplitz weights, one per row tap.
    w2_ref : (4, W*Cin, 2*W*Cout)  bf16  conv2 sub-pixel weights, index = 2*phase + tap.
    s1_ref, b1_ref : (1, W*Cin)    f32   folded BN1 scale/bias (incl. conv1 bias).
    s2_ref, b2_ref : (1, 2*W*Cout) f32   folded BN2 scale/bias (or 1 / conv2 bias).
    o_ref  : (2, th, 2*W*Cout)     f32   o[a, i, j*2*Cout + b*Cout + c]
                                         = y[c, 2*(h*th+i)+a, 2*j+b].
    """
    hrows = th + 2   # conv1 rows needed: the tile's rows plus one above / one below

    # ---- conv1: 3 lane-dense row-tap matmuls (K=(W+2)*Cin, N=W*Cin) ----
    acc1 = jnp.dot(x_ref[pl.ds(0, hrows), :], w1_ref[0],
                   preferred_element_type=jnp.float32)
    acc1 += jnp.dot(x_ref[pl.ds(1, hrows), :], w1_ref[1],
                    preferred_element_type=jnp.float32)
    acc1 += jnp.dot(x_ref[pl.ds(2, hrows), :], w1_ref[2],
                    preferred_element_type=jnp.float32)

    # ---- folded BN1 + ReLU in f32; rows outside the image are conv2's zero padding ----
    h = jnp.maximum(acc1 * s1_ref[...] + b1_ref[...], 0.0)
    row = pl.program_id(1) * th + lax.broadcasted_iota(jnp.int32, (hrows, 1), 0)
    h = jnp.where(jnp.logical_and(row >= 1, row <= H), h, 0.0).astype(jnp.bfloat16)

    # ---- conv2 fused with the 2x nearest upsample (sub-pixel decomposition) ----
    # Band `a` holds output rows 2*i+a; its columns are already (x, col-phase, c_out)
    # interleaved, so each store is a full-width lane-dense slab (no masked stores,
    # no interleave reshapes).
    for a in (0, 1):
        acc2 = jnp.dot(h[a:a + th, :], w2_ref[2 * a],
                       preferred_element_type=jnp.float32)
        acc2 += jnp.dot(h[a + 1:a + 1 + th, :], w2_ref[2 * a + 1],
                        preferred_element_type=jnp.float32)
        z = acc2 * s2_ref[...] + b2_ref[...]
        out = jnp.tanh(z) if is_last else jnp.maximum(z, 0.0)
        o_ref[a, :, :] = out.astype(o_ref.dtype)


def _fold_bn(gamma, beta, mean, var, conv_bias, eps=1e-5):
    """Fold eval-mode BatchNorm + preceding conv bias into per-channel scale/bias."""
    scale = (gamma / jnp.sqrt(var + eps)).astype(jnp.float32)
    bias = (beta + scale * (conv_bias - mean)).astype(jnp.float32)
    return scale, bias


def _conv1_lane_weights(w_oihw, W):
    """(3, (W+2)*Cin, W*Cout) block-Toeplitz matrices, one per conv kernel row."""
    w = jnp.transpose(w_oihw, (2, 3, 1, 0)).astype(jnp.float32)   # (3, 3, Cin, Cout)
    mats = []
    for dy in range(3):
        m = 0
        for dx in range(3):
            m = m + jnp.kron(jnp.eye(W + 2, W, k=-dx, dtype=jnp.float32), w[dy, dx])
        mats.append(m)
    return jnp.stack(mats)


_MERGE = ((0, 1, 1), (0, 0, 1))   # nearest-2x: (phase, kernel offset) -> effective tap


def _conv2_subpixel_lane_weights(w_oihw, W):
    """(4, W*Cin, 2*W*Cout) sub-pixel weights for upsample(2x nearest)+conv3x3.

    Index = 2*row_phase + row_tap.  Output column j*2*Cout + b*Cout + c corresponds to
    output pixel (2*j+b, channel c), so the matmul result is already interleaved for a
    lane-dense store.  Conv2's zero padding is encoded by omitting out-of-range taps.
    """
    w = jnp.transpose(w_oihw, (2, 3, 1, 0)).astype(jnp.float32)   # (3, 3, Cin, Cout)
    Cin, Cout = w.shape[2], w.shape[3]
    mats = []
    for a in range(2):            # output row phase
        for t in range(2):        # effective row tap
            m = 0
            for b in range(2):        # output col phase
                for s in range(2):    # effective col tap
                    eff = 0
                    for dy in range(3):
                        for dx in range(3):
                            if _MERGE[a][dy] == t and _MERGE[b][dx] == s:
                                eff = eff + w[dy, dx]
                    blk = jnp.zeros((Cin, 2 * Cout), jnp.float32)
                    blk = blk.at[:, b * Cout:(b + 1) * Cout].set(eff)
                    m = m + jnp.kron(jnp.eye(W, W, k=1 - b - s, dtype=jnp.float32), blk)
            mats.append(m)
    return jnp.stack(mats)


@functools.partial(jax.jit, static_argnames=("is_last", "th"))
def upblock_forward(x_nchw, params, *, is_last=False, th=8):
    """UpBlock forward. x_nchw: (N, Cin, H, W) f32 -> (N, Cout, 2H, 2W) f32."""
    (w1, cb1, g1, be1, m1, v1, w2, cb2, g2, be2, m2, v2) = params
    N, C, H, W = x_nchw.shape
    Cout = w2.shape[0]

    # H tile: largest divisor of H <= th; ensure >=2 total grid steps when possible
    # (v7x megacore sharding + pipeline overlap).
    th = max(1, min(th, H))
    while H % th:
        th -= 1
    if N * (H // th) < 2 and th > 1:
        t = th // 2
        while t >= 1 and H % t:
            t -= 1
        th = max(t, 1)
    nh = H // th

    # Lane-packed weights / folded BN, pre-cast to the MXU dtype in the wrapper.
    w1big = _conv1_lane_weights(w1, W).astype(jnp.bfloat16)            # (3,(W+2)C, WC)
    w2big = _conv2_subpixel_lane_weights(w2, W).astype(jnp.bfloat16)   # (4, WC, 2WCout)
    s1, b1 = _fold_bn(g1, be1, m1, v1, cb1)
    if is_last:
        s2 = jnp.ones((Cout,), jnp.float32)
        b2 = cb2.astype(jnp.float32)
    else:
        s2, b2 = _fold_bn(g2, be2, m2, v2, cb2)
    s1t = jnp.tile(s1, W).reshape(1, W * C)
    b1t = jnp.tile(b1, W).reshape(1, W * C)
    s2t = jnp.tile(s2, 2 * W).reshape(1, 2 * W * Cout)
    b2t = jnp.tile(b2, 2 * W).reshape(1, 2 * W * Cout)

    # NCHW -> lane-packed (N, H+4, (W+2)*C) bf16 with conv1 column halo and 2 zero rows
    # top/bottom, then H tiles with a duplicated 2-row halo (keeps BlockSpec rectangular).
    x_lane = jnp.pad(jnp.transpose(x_nchw, (0, 2, 3, 1)),
                     ((0, 0), (2, 2), (1, 1), (0, 0)))
    x_lane = x_lane.reshape(N, H + 4, (W + 2) * C).astype(jnp.bfloat16)
    x_tiles = jnp.stack([x_lane[:, i * th:i * th + th + 4, :] for i in range(nh)],
                        axis=1)                                    # (N, nh, th+4, (W+2)C)

    kernel = functools.partial(_upblock_kernel, th=th, H=H, is_last=is_last)
    out = pl.pallas_call(
        kernel,
        out_shape=jax.ShapeDtypeStruct((N, 2, H, 2 * W * Cout), jnp.float32),
        grid_spec=pltpu.PrefetchScalarGridSpec(
            num_scalar_prefetch=0,
            grid=(N, nh),
            in_specs=[
                pl.BlockSpec((None, None, th + 4, (W + 2) * C),
                             lambda n, h: (n, h, 0, 0)),
                pl.BlockSpec((3, (W + 2) * C, W * C), lambda n, h: (0, 0, 0)),
                pl.BlockSpec((4, W * C, 2 * W * Cout), lambda n, h: (0, 0, 0)),
                pl.BlockSpec((1, W * C), lambda n, h: (0, 0)),
                pl.BlockSpec((1, W * C), lambda n, h: (0, 0)),
                pl.BlockSpec((1, 2 * W * Cout), lambda n, h: (0, 0)),
                pl.BlockSpec((1, 2 * W * Cout), lambda n, h: (0, 0)),
            ],
            out_specs=pl.BlockSpec((None, 2, th, 2 * W * Cout),
                                   lambda n, h: (n, 0, h, 0)),
        ),
        compiler_params=pltpu.CompilerParams(
            dimension_semantics=("parallel", "parallel"),
            vmem_limit_bytes=32 * 1024 * 1024),
    )(x_tiles, w1big, w2big, s1t, b1t, s2t, b2t)

    # out[n, a, i, j*2*Cout + b*Cout + c] = y[n, c, 2i+a, 2j+b]  ->  NCHW.
    out = out.reshape(N, 2, H, W, 2, Cout)
    out = jnp.transpose(out, (0, 5, 2, 1, 3, 4)).reshape(N, Cout, 2 * H, 2 * W)
    return out


def upblock_reference(x_nchw, params, *, is_last=False, mxu_dtype=jnp.float32):
    """Pure-JAX reference. mxu_dtype=bfloat16 mirrors the kernel's MXU precision."""
    (w1, cb1, g1, be1, m1, v1, w2, cb2, g2, be2, m2, v2) = params
    dn = ('NHWC', 'HWIO', 'NHWC')
    x = jnp.transpose(x_nchw, (0, 2, 3, 1))
    w1h = jnp.transpose(w1, (2, 3, 1, 0))
    w2h = jnp.transpose(w2, (2, 3, 1, 0))

    s1, b1 = _fold_bn(g1, be1, m1, v1, cb1)
    y = lax.conv_general_dilated(x.astype(mxu_dtype), w1h.astype(mxu_dtype), (1, 1),
                                 'SAME', dimension_numbers=dn,
                                 preferred_element_type=jnp.float32)
    y = jnp.maximum(y * s1.reshape(1, 1, 1, -1) + b1.reshape(1, 1, 1, -1), 0.0)
    y = y.astype(mxu_dtype)
    y = jnp.repeat(jnp.repeat(y, 2, axis=1), 2, axis=2)          # 2x nearest upsample
    y2 = lax.conv_general_dilated(y, w2h.astype(mxu_dtype), (1, 1), 'SAME',
                                  dimension_numbers=dn,
                                  preferred_element_type=jnp.float32)
    if is_last:
        out = jnp.tanh(y2 + cb2.reshape(1, 1, 1, -1))
    else:
        s2, b2 = _fold_bn(g2, be2, m2, v2, cb2)
        out = jnp.maximum(y2 * s2.reshape(1, 1, 1, -1) + b2.reshape(1, 1, 1, -1), 0.0)
    return jnp.transpose(out, (0, 3, 1, 2))


if __name__ == "__main__":
    key = jax.random.PRNGKey(0)
    ks = jax.random.split(key, 13)

    N, C_in, C_out, H, W = 2, 8, 4, 16, 16
    x = jax.random.normal(ks[0], (N, C_in, H, W), jnp.float32)

    # Deterministic synthetic parameters (nn.Conv2d OIHW + bias, nn.BatchNorm2d eval).
    w1 = 0.1 * jax.random.normal(ks[1], (C_in, C_in, 3, 3), jnp.float32)
    cb1 = 0.1 * jax.random.normal(ks[2], (C_in,), jnp.float32)
    g1 = 1.0 + 0.1 * jax.random.normal(ks[3], (C_in,), jnp.float32)
    be1 = 0.1 * jax.random.normal(ks[4], (C_in,), jnp.float32)
    m1 = 0.1 * jax.random.normal(ks[5], (C_in,), jnp.float32)
    v1 = 0.5 + jnp.abs(jax.random.normal(ks[6], (C_in,), jnp.float32))
    w2 = 0.1 * jax.random.normal(ks[7], (C_out, C_in, 3, 3), jnp.float32)
    cb2 = 0.1 * jax.random.normal(ks[8], (C_out,), jnp.float32)
    g2 = 1.0 + 0.1 * jax.random.normal(ks[9], (C_out,), jnp.float32)
    be2 = 0.1 * jax.random.normal(ks[10], (C_out,), jnp.float32)
    m2 = 0.1 * jax.random.normal(ks[11], (C_out,), jnp.float32)
    v2 = 0.5 + jnp.abs(jax.random.normal(ks[12], (C_out,), jnp.float32))
    params = (w1, cb1, g1, be1, m1, v1, w2, cb2, g2, be2, m2, v2)

    for is_last in (False, True):
        out = jax.block_until_ready(upblock_forward(x, params, is_last=is_last))
        assert out.shape == (N, C_out, 2 * H, 2 * W)

        # Check vs a reference using the same bf16 MXU dtype (small extra slack because
        # the sub-pixel weights are summed in f32 and rounded to bf16 after merging).
        ref_bf16 = upblock_reference(x, params, is_last=is_last, mxu_dtype=jnp.bfloat16)
        assert jnp.allclose(out, ref_bf16, atol=2e-2, rtol=2e-2), \
            f"mismatch vs bf16-matched reference (is_last={is_last})"

        # Loose sanity check vs the full-f32 reference (bf16 MXU rounding tolerance).
        ref_f32 = upblock_reference(x, params, is_last=is_last, mxu_dtype=jnp.float32)
        assert jnp.allclose(out, ref_f32, atol=8e-2, rtol=5e-2), \
            f"mismatch vs f32 reference (is_last={is_last})"

    print("KERNEL_OK")
</pallas_src>

<mosaic_0001>
module attributes {stable_mosaic.version = 11 : i64} {
  func.func @_upblock_kernel(%arg0: i32, %arg1: i32, %arg2: memref<1x1x12x144xbf16, #tpu.memory_space<vmem>>, %arg3: memref<3x144x128xbf16, #tpu.memory_space<vmem>>, %arg4: memref<4x128x128xbf16, #tpu.memory_space<vmem>>, %arg5: memref<1x128xf32, #tpu.memory_space<vmem>>, %arg6: memref<1x128xf32, #tpu.memory_space<vmem>>, %arg7: memref<1x128xf32, #tpu.memory_space<vmem>>, %arg8: memref<1x128xf32, #tpu.memory_space<vmem>>, %arg9: memref<1x2x8x128xf32, #tpu.memory_space<vmem>>) attributes {dimension_semantics = [#tpu.dimension_semantics<parallel>, #tpu.dimension_semantics<parallel>], iteration_bounds = array<i64: 2, 2>, scalar_prefetch = 0 : i64, scratch_operands = 0 : i64, tpu.core_type = #tpu.core_type<tc>, window_params = [{transform_indices = @transform_0, window_bounds = array<i64: 1, 1, 12, 144>}, {pipeline_mode = #tpu.pipeline_mode<synchronous>, transform_indices = @transform_1, window_bounds = array<i64: 3, 144, 128>}, {pipeline_mode = #tpu.pipeline_mode<synchronous>, transform_indices = @transform_2, window_bounds = array<i64: 4, 128, 128>}, {pipeline_mode = #tpu.pipeline_mode<synchronous>, transform_indices = @transform_3, window_bounds = array<i64: 1, 128>}, {pipeline_mode = #tpu.pipeline_mode<synchronous>, transform_indices = @transform_4, window_bounds = array<i64: 1, 128>}, {pipeline_mode = #tpu.pipeline_mode<synchronous>, transform_indices = @transform_5, window_bounds = array<i64: 1, 128>}, {pipeline_mode = #tpu.pipeline_mode<synchronous>, transform_indices = @transform_6, window_bounds = array<i64: 1, 128>}, {transform_indices = @transform_7, window_bounds = array<i64: 1, 2, 8, 128>}]} {
    %c0 = arith.constant 0 : index
    %c0_0 = arith.constant 0 : index
    %c0_1 = arith.constant 0 : index
    %c0_2 = arith.constant 0 : index
    %0 = vector.load %arg2[%c0, %c0_0, %c0_1, %c0_2] : memref<1x1x12x144xbf16, #tpu.memory_space<vmem>>, vector<1x1x10x144xbf16>
    %1 = vector.shape_cast %0 : vector<1x1x10x144xbf16> to vector<10x144xbf16>
    %c0_3 = arith.constant 0 : index
    %c0_4 = arith.constant 0 : index
    %c0_5 = arith.constant 0 : index
    %2 = vector.load %arg3[%c0_3, %c0_4, %c0_5] : memref<3x144x128xbf16, #tpu.memory_space<vmem>>, vector<1x144x128xbf16>
    %3 = vector.shape_cast %2 : vector<1x144x128xbf16> to vector<144x128xbf16>
    %cst = arith.constant dense<0.000000e+00> : vector<10x128xf32>
    %4 = tpu.matmul %1, %3, %cst {dimension_numbers = #tpu.dot_dimension_numbers<[1], [0], [0], [1], [0, 0, 1, 1], [], []>} : vector<10x144xbf16>, vector<144x128xbf16>, vector<10x128xf32> -> vector<10x128xf32>
    %c0_6 = arith.constant 0 : index
    %c0_7 = arith.constant 0 : index
    %c1 = arith.constant 1 : index
    %c0_8 = arith.constant 0 : index
    %5 = vector.load %arg2[%c0_6, %c0_7, %c1, %c0_8] : memref<1x1x12x144xbf16, #tpu.memory_space<vmem>>, vector<1x1x10x144xbf16>
    %6 = vector.shape_cast %5 : vector<1x1x10x144xbf16> to vector<10x144xbf16>
    %c1_9 = arith.constant 1 : index
    %c0_10 = arith.constant 0 : index
    %c0_11 = arith.constant 0 : index
    %7 = vector.load %arg3[%c1_9, %c0_10, %c0_11] : memref<3x144x128xbf16, #tpu.memory_space<vmem>>, vector<1x144x128xbf16>
    %8 = vector.shape_cast %7 : vector<1x144x128xbf16> to vector<144x128xbf16>
    %cst_12 = arith.constant dense<0.000000e+00> : vector<10x128xf32>
    %9 = tpu.matmul %6, %8, %cst_12 {dimension_numbers = #tpu.dot_dimension_numbers<[1], [0], [0], [1], [0, 0, 1, 1], [], []>} : vector<10x144xbf16>, vector<144x128xbf16>, vector<10x128xf32> -> vector<10x128xf32>
    %10 = arith.addf %4, %9 : vector<10x128xf32>
    %c0_13 = arith.constant 0 : index
    %c0_14 = arith.constant 0 : index
    %c2 = arith.constant 2 : index
    %c0_15 = arith.constant 0 : index
    %11 = vector.load %arg2[%c0_13, %c0_14, %c2, %c0_15] : memref<1x1x12x144xbf16, #tpu.memory_space<vmem>>, vector<1x1x10x144xbf16>
    %12 = vector.shape_cast %11 : vector<1x1x10x144xbf16> to vector<10x144xbf16>
    %c2_16 = arith.constant 2 : index
    %c0_17 = arith.constant 0 : index
    %c0_18 = arith.constant 0 : index
    %13 = vector.load %arg3[%c2_16, %c0_17, %c0_18] : memref<3x144x128xbf16, #tpu.memory_space<vmem>>, vector<1x144x128xbf16>
    %14 = vector.shape_cast %13 : vector<1x144x128xbf16> to vector<144x128xbf16>
    %cst_19 = arith.constant dense<0.000000e+00> : vector<10x128xf32>
    %15 = tpu.matmul %12, %14, %cst_19 {dimension_numbers = #tpu.dot_dimension_numbers<[1], [0], [0], [1], [0, 0, 1, 1], [], []>} : vector<10x144xbf16>, vector<144x128xbf16>, vector<10x128xf32> -> vector<10x128xf32>
    %16 = arith.addf %10, %15 : vector<10x128xf32>
    %c0_20 = arith.constant 0 : index
    %c0_21 = arith.constant 0 : index
    %17 = vector.load %arg5[%c0_20, %c0_21] : memref<1x128xf32, #tpu.memory_space<vmem>>, vector<1x128xf32>
    %18 = vector.broadcast %17 : vector<1x128xf32> to vector<10x128xf32>
    %19 = arith.mulf %16, %18 : vector<10x128xf32>
    %c0_22 = arith.constant 0 : index
    %c0_23 = arith.constant 0 : index
    %20 = vector.load %arg6[%c0_22, %c0_23] : memref<1x128xf32, #tpu.memory_space<vmem>>, vector<1x128xf32>
    %21 = vector.broadcast %20 : vector<1x128xf32> to vector<10x128xf32>
    %22 = arith.addf %19, %21 : vector<10x128xf32>
    %cst_24 = arith.constant 0.000000e+00 : f32
    %23 = vector.broadcast %cst_24 : f32 to vector<10x128xf32>
    %24 = arith.maximumf %22, %23 : vector<10x128xf32>
    %c8_i32 = arith.constant 8 : i32
    %25 = arith.muli %arg1, %c8_i32 : i32
    %26 = tpu.iota {dimensions = array<i32: 0>} : vector<10x1xi32>
    %27 = vector.broadcast %25 : i32 to vector<10x1xi32>
    %28 = arith.addi %27, %26 : vector<10x1xi32>
    %c1_i32 = arith.constant 1 : i32
    %29 = vector.broadcast %c1_i32 : i32 to vector<10x1xi32>
    %30 = arith.cmpi sge, %28, %29 : vector<10x1xi32>
    %c16_i32 = arith.constant 16 : i32
    %31 = vector.broadcast %c16_i32 : i32 to vector<10x1xi32>
    %32 = arith.cmpi sle, %28, %31 : vector<10x1xi32>
    %33 = arith.andi %30, %32 : vector<10x1xi1>
    %cst_25 = arith.constant 0.000000e+00 : f32
    %34 = vector.shape_cast %33 : vector<10x1xi1> to vector<10x1xi1>
    %35 = vector.broadcast %34 : vector<10x1xi1> to vector<10x128xi1>
    %36 = vector.broadcast %cst_25 : f32 to vector<10x128xf32>
    %37 = arith.select %35, %24, %36 : vector<10x128xi1>, vector<10x128xf32>
    %38 = arith.truncf %37 : vector<10x128xf32> to vector<10x128xbf16>
    %39 = vector.extract_strided_slice %38 {offsets = [0, 0], sizes = [8, 128], strides = [1, 1]} : vector<10x128xbf16> to vector<8x128xbf16>
    %c0_26 = arith.constant 0 : index
    %c0_27 = arith.constant 0 : index
    %c0_28 = arith.constant 0 : index
    %40 = vector.load %arg4[%c0_26, %c0_27, %c0_28] : memref<4x128x128xbf16, #tpu.memory_space<vmem>>, vector<1x128x128xbf16>
    %41 = vector.shape_cast %40 : vector<1x128x128xbf16> to vector<128x128xbf16>
    %cst_29 = arith.constant dense<0.000000e+00> : vector<8x128xf32>
    %42 = tpu.matmul %39, %41, %cst_29 {dimension_numbers = #tpu.dot_dimension_numbers<[1], [0], [0], [1], [0, 0, 1, 1], [], []>} : vector<8x128xbf16>, vector<128x128xbf16>, vector<8x128xf32> -> vector<8x128xf32>
    %43 = vector.extract_strided_slice %38 {offsets = [1, 0], sizes = [8, 128], strides = [1, 1]} : vector<10x128xbf16> to vector<8x128xbf16>
    %c1_30 = arith.constant 1 : index
    %c0_31 = arith.constant 0 : index
    %c0_32 = arith.constant 0 : index
    %44 = vector.load %arg4[%c1_30, %c0_31, %c0_32] : memref<4x128x128xbf16, #tpu.memory_space<vmem>>, vector<1x128x128xbf16>
    %45 = vector.shape_cast %44 : vector<1x128x128xbf16> to vector<128x128xbf16>
    %cst_33 = arith.constant dense<0.000000e+00> : vector<8x128xf32>
    %46 = tpu.matmul %43, %45, %cst_33 {dimension_numbers = #tpu.dot_dimension_numbers<[1], [0], [0], [1], [0, 0, 1, 1], [], []>} : vector<8x128xbf16>, vector<128x128xbf16>, vector<8x128xf32> -> vector<8x128xf32>
    %47 = arith.addf %42, %46 : vector<8x128xf32>
    %c0_34 = arith.constant 0 : index
    %c0_35 = arith.constant 0 : index
    %48 = vector.load %arg7[%c0_34, %c0_35] : memref<1x128xf32, #tpu.memory_space<vmem>>, vector<1x128xf32>
    %49 = vector.broadcast %48 : vector<1x128xf32> to vector<8x128xf32>
    %50 = arith.mulf %47, %49 : vector<8x128xf32>
    %c0_36 = arith.constant 0 : index
    %c0_37 = arith.constant 0 : index
    %51 = vector.load %arg8[%c0_36, %c0_37] : memref<1x128xf32, #tpu.memory_space<vmem>>, vector<1x128xf32>
    %52 = vector.broadcast %51 : vector<1x128xf32> to vector<8x128xf32>
    %53 = arith.addf %50, %52 : vector<8x128xf32>
    %cst_38 = arith.constant 0.000000e+00 : f32
    %54 = vector.broadcast %cst_38 : f32 to vector<8x128xf32>
    %55 = arith.maximumf %53, %54 : vector<8x128xf32>
    %c0_39 = arith.constant 0 : index
    %c0_40 = arith.constant 0 : index
    %c0_41 = arith.constant 0 : index
    %c0_42 = arith.constant 0 : index
    %56 = vector.load %arg9[%c0_39, %c0_40, %c0_41, %c0_42] : memref<1x2x8x128xf32, #tpu.memory_space<vmem>>, vector<1x1x8x128xf32>
    %57 = vector.shape_cast %56 : vector<1x1x8x128xf32> to vector<8x128xf32>
    %58 = vector.shape_cast %55 : vector<8x128xf32> to vector<1x1x8x128xf32>
    tpu.vector_store %arg9[%c0_39, %c0_40, %c0_41, %c0_42], %58 {strides = array<i32>} : memref<1x2x8x128xf32, #tpu.memory_space<vmem>>, vector<1x1x8x128xf32>,
    %59 = vector.extract_strided_slice %38 {offsets = [1, 0], sizes = [8, 128], strides = [1, 1]} : vector<10x128xbf16> to vector<8x128xbf16>
    %c2_43 = arith.constant 2 : index
    %c0_44 = arith.constant 0 : index
    %c0_45 = arith.constant 0 : index
    %60 = vector.load %arg4[%c2_43, %c0_44, %c0_45] : memref<4x128x128xbf16, #tpu.memory_space<vmem>>, vector<1x128x128xbf16>
    %61 = vector.shape_cast %60 : vector<1x128x128xbf16> to vector<128x128xbf16>
    %cst_46 = arith.constant dense<0.000000e+00> : vector<8x128xf32>
    %62 = tpu.matmul %59, %61, %cst_46 {dimension_numbers = #tpu.dot_dimension_numbers<[1], [0], [0], [1], [0, 0, 1, 1], [], []>} : vector<8x128xbf16>, vector<128x128xbf16>, vector<8x128xf32> -> vector<8x128xf32>
    %63 = vector.extract_strided_slice %38 {offsets = [2, 0], sizes = [8, 128], strides = [1, 1]} : vector<10x128xbf16> to vector<8x128xbf16>
    %c3 = arith.constant 3 : index
    %c0_47 = arith.constant 0 : index
    %c0_48 = arith.constant 0 : index
    %64 = vector.load %arg4[%c3, %c0_47, %c0_48] : memref<4x128x128xbf16, #tpu.memory_space<vmem>>, vector<1x128x128xbf16>
    %65 = vector.shape_cast %64 : vector<1x128x128xbf16> to vector<128x128xbf16>
    %cst_49 = arith.constant dense<0.000000e+00> : vector<8x128xf32>
    %66 = tpu.matmul %63, %65, %cst_49 {dimension_numbers = #tpu.dot_dimension_numbers<[1], [0], [0], [1], [0, 0, 1, 1], [], []>} : vector<8x128xbf16>, vector<128x128xbf16>, vector<8x128xf32> -> vector<8x128xf32>
    %67 = arith.addf %62, %66 : vector<8x128xf32>
    %c0_50 = arith.constant 0 : index
    %c0_51 = arith.constant 0 : index
    %68 = vector.load %arg7[%c0_50, %c0_51] : memref<1x128xf32, #tpu.memory_space<vmem>>, vector<1x128xf32>
    %69 = vector.broadcast %68 : vector<1x128xf32> to vector<8x128xf32>
    %70 = arith.mulf %67, %69 : vector<8x128xf32>
    %c0_52 = arith.constant 0 : index
    %c0_53 = arith.constant 0 : index
    %71 = vector.load %arg8[%c0_52, %c0_53] : memref<1x128xf32, #tpu.memory_space<vmem>>, vector<1x128xf32>
    %72 = vector.broadcast %71 : vector<1x128xf32> to vector<8x128xf32>
    %73 = arith.addf %70, %72 : vector<8x128xf32>
    %cst_54 = arith.constant 0.000000e+00 : f32
    %74 = vector.broadcast %cst_54 : f32 to vector<8x128xf32>
    %75 = arith.maximumf %73, %74 : vector<8x128xf32>
    %c0_55 = arith.constant 0 : index
    %c1_56 = arith.constant 1 : index
    %c0_57 = arith.constant 0 : index
    %c0_58 = arith.constant 0 : index
    %76 = vector.load %arg9[%c0_55, %c1_56, %c0_57, %c0_58] : memref<1x2x8x128xf32, #tpu.memory_space<vmem>>, vector<1x1x8x128xf32>
    %77 = vector.shape_cast %76 : vector<1x1x8x128xf32> to vector<8x128xf32>
    %78 = vector.shape_cast %75 : vector<8x128xf32> to vector<1x1x8x128xf32>
    tpu.vector_store %arg9[%c0_55, %c1_56, %c0_57, %c0_58], %78 {strides = array<i32>} : memref<1x2x8x128xf32, #tpu.memory_space<vmem>>, vector<1x1x8x128xf32>,
    return
  }
  func.func @transform_0(%arg0: i32, %arg1: i32) -> (i32, i32, i32, i32) {
    %c0_i32 = arith.constant 0 : i32
    %c0_i32_0 = arith.constant 0 : i32
    %c0_i32_1 = arith.constant 0 : i32
    return %arg0, %arg1, %c0_i32, %c0_i32_0 : i32, i32, i32, i32
  }
  func.func @transform_1(%arg0: i32, %arg1: i32) -> (i32, i32, i32) {
    %c0_i32 = arith.constant 0 : i32
    %c0_i32_0 = arith.constant 0 : i32
    %c0_i32_1 = arith.constant 0 : i32
    %c0_i32_2 = arith.constant 0 : i32
    return %c0_i32, %c0_i32_0, %c0_i32_1 : i32, i32, i32
  }
  func.func @transform_2(%arg0: i32, %arg1: i32) -> (i32, i32, i32) {
    %c0_i32 = arith.constant 0 : i32
    %c0_i32_0 = arith.constant 0 : i32
    %c0_i32_1 = arith.constant 0 : i32
    %c0_i32_2 = arith.constant 0 : i32
    return %c0_i32, %c0_i32_0, %c0_i32_1 : i32, i32, i32
  }
  func.func @transform_3(%arg0: i32, %arg1: i32) -> (i32, i32) {
    %c0_i32 = arith.constant 0 : i32
    %c0_i32_0 = arith.constant 0 : i32
    %c0_i32_1 = arith.constant 0 : i32
    return %c0_i32, %c0_i32_0 : i32, i32
  }
  func.func @transform_4(%arg0: i32, %arg1: i32) -> (i32, i32) {
    %c0_i32 = arith.constant 0 : i32
    %c0_i32_0 = arith.constant 0 : i32
    %c0_i32_1 = arith.constant 0 : i32
    return %c0_i32, %c0_i32_0 : i32, i32
  }
  func.func @transform_5(%arg0: i32, %arg1: i32) -> (i32, i32) {
    %c0_i32 = arith.constant 0 : i32
    %c0_i32_0 = arith.constant 0 : i32
    %c0_i32_1 = arith.constant 0 : i32
    return %c0_i32, %c0_i32_0 : i32, i32
  }
  func.func @transform_6(%arg0: i32, %arg1: i32) -> (i32, i32) {
    %c0_i32 = arith.constant 0 : i32
    %c0_i32_0 = arith.constant 0 : i32
    %c0_i32_1 = arith.constant 0 : i32
    return %c0_i32, %c0_i32_0 : i32, i32
  }
  func.func @transform_7(%arg0: i32, %arg1: i32) -> (i32, i32, i32, i32) {
    %c0_i32 = arith.constant 0 : i32
    %c0_i32_0 = arith.constant 0 : i32
    %c0_i32_1 = arith.constant 0 : i32
    return %arg0, %c0_i32, %arg1, %c0_i32_0 : i32, i32, i32, i32
  }
}

</mosaic_0001>

<llo_original>
// kernel: tile.33
$region0: #{tile.33}
  #allocation0 [shape = 's32[1]{0}', space=sflag, size = 0x4, scoped, tag = 'scoped memory for tile.33']
  %s0 = inlined_call_operand.vmem [shape: f32[4], index: 0, kind: input, shape index: {}]
  %s1 = inlined_call_operand.vmem [shape: f32[32,4], index: 1, kind: output, shape index: {}]
  // Predicated region
  $region2: #{tile.33} parent=0 // pred_check
    _
  $region3: #{tile.33} parent=0 // pred_check_branch
    %3 = sbr.rel (0) target = $region5
  $region4: #{tile.33} parent=0 // pred_region
    _
  $region5: #{tile.33} parent=0 // pred_fallthru
    _
  %v4 = vld [vmem:[%s0] ss:$0 sm:$0xff]
  %5 = vst [vmem:[%s1] sm:$0xff] %v4
  %s6 = scalar_lea.vmem %s1, 8
  %7 = vst [vmem:[%s6] sm:$0xff] %v4
  %s8 = scalar_lea.vmem %s1, 16
  %9 = vst [vmem:[%s8] sm:$0xff] %v4
  %s10 = scalar_lea.vmem %s1, 24
  %11 = vst [vmem:[%s10] sm:$0xff] %v4

// kernel: tile.34
$region0: #{tile.34}
  %s0 = inlined_call_operand.vmem [shape: f32[32,4], index: 0, kind: input, shape index: {}]
  %s1 = inlined_call_operand.vmem [shape: f32[1,128], index: 1, kind: output, shape index: {}]
  $region1: #{tile.34} parent=0
    #allocation0 [shape = 'u8[4096]{0}', space=vmem, size = 0x1000, scoped, tag = 'scoped mem for output reshape']
    %v2 = vld [vmem:[%s0] sm:$0x1]
    %vm3 = vcmask 31744
    %4 = vst.msk [vmem:[#allocation0] sm:$0x1] %vm3, %v2
    %s5 = scalar_lea.vmem %s0, 31
    %v6 = vld [vmem:[%s5] sm:$0x1]
    %7 = vrot.lane.b32.xlu0 %v6, 124
    %v8 = vpop.permute.xlu0 %7
    %vm9 = vcmask 1048544
    %10 = vst.msk [vmem:[#allocation0] sm:$0x1] %vm9, %v8
    %s11 = scalar_lea.vmem %s0, 30
    %v12 = vld [vmem:[%s11] sm:$0x1]
    %13 = vrot.lane.b32.xlu0 %v12, 120
    %v14 = vpop.permute.xlu0 %13
    %vm15 = vcmask 1015744
    %16 = vst.msk [vmem:[#allocation0] sm:$0x1] %vm15, %v14
    %s17 = scalar_lea.vmem %s0, 29
    %v18 = vld [vmem:[%s17] sm:$0x1]
    %19 = vrot.lane.b32.xlu0 %v18, 116
    %v20 = vpop.permute.xlu0 %19
    %vm21 = vcmask 982944
    %22 = vst.msk [vmem:[#allocation0] sm:$0x1] %vm21, %v20
    %s23 = scalar_lea.vmem %s0, 28
    %v24 = vld [vmem:[%s23] sm:$0x1]
    %25 = vrot.lane.b32.xlu0 %v24, 112
    %v26 = vpop.permute.xlu0 %25
    %vm27 = vcmask 950144
    %28 = vst.msk [vmem:[#allocation0] sm:$0x1] %vm27, %v26
    %s29 = scalar_lea.vmem %s0, 27
    %v30 = vld [vmem:[%s29] sm:$0x1]
    %31 = vrot.lane.b32.xlu0 %v30, 108
    %v32 = vpop.permute.xlu0 %31
    %vm33 = vcmask 917344
    %34 = vst.msk [vmem:[#allocation0] sm:$0x1] %vm33, %v32
    %s35 = scalar_lea.vmem %s0, 26
    %v36 = vld [vmem:[%s35] sm:$0x1]
    %37 = vrot.lane.b32.xlu0 %v36, 104
    %v38 = vpop.permute.xlu0 %37
    %vm39 = vcmask 884544
    %40 = vst.msk [vmem:[#allocation0] sm:$0x1] %vm39, %v38
    %s41 = scalar_lea.vmem %s0, 25
    %v42 = vld [vmem:[%s41] sm:$0x1]
    %43 = vrot.lane.b32.xlu0 %v42, 100
    %v44 = vpop.permute.xlu0 %43
    %vm45 = vcmask 851744
    %46 = vst.msk [vmem:[#allocation0] sm:$0x1] %vm45, %v44
    %s47 = scalar_lea.vmem %s0, 24
    %v48 = vld [vmem:[%s47] sm:$0x1]
    %49 = vrot.lane.b32.xlu0 %v48, 96
    %v50 = vpop.permute.xlu0 %49
    %vm51 = vcmask 818944
    %52 = vst.msk [vmem:[#allocation0] sm:$0x1] %vm51, %v50
    %s53 = scalar_lea.vmem %s0, 23
    %v54 = vld [vmem:[%s53] sm:$0x1]
    %55 = vrot.lane.b32.xlu0 %v54, 92
    %v56 = vpop.permute.xlu0 %55
    %vm57 = vcmask 786144
    %58 = vst.msk [vmem:[#allocation0] sm:$0x1] %vm57, %v56
    %s59 = scalar_lea.vmem %s0, 22
    %v60 = vld [vmem:[%s59] sm:$0x1]
    %61 = vrot.lane.b32.xlu0 %v60, 88
    %v62 = vpop.permute.xlu0 %61
    %vm63 = vcmask 753344
    %64 = vst.msk [vmem:[#allocation0] sm:$0x1] %vm63, %v62
    %s65 = scalar_lea.vmem %s0, 21
    %v66 = vld [vmem:[%s65] sm:$0x1]
    %67 = vrot.lane.b32.xlu0 %v66, 84
    %v68 = vpop.permute.xlu0 %67
    %vm69 = vcmask 720544
    %70 = vst.msk [vmem:[#allocation0] sm:$0x1] %vm69, %v68
    %s71 = scalar_lea.vmem %s0, 20
    %v72 = vld [vmem:[%s71] sm:$0x1]
    %73 = vrot.lane.b32.xlu0 %v72, 80
    %v74 = vpop.permute.xlu0 %73
    %vm75 = vcmask 687744
    %76 = vst.msk [vmem:[#allocation0] sm:$0x1] %vm75, %v74
    %s77 = scalar_lea.vmem %s0, 19
    %v78 = vld [vmem:[%s77] sm:$0x1]
    %79 = vrot.lane.b32.xlu0 %v78, 76
    %v80 = vpop.permute.xlu0 %79
    %vm81 = vcmask 654944
    %82 = vst.msk [vmem:[#allocation0] sm:$0x1] %vm81, %v80
    %s83 = scalar_lea.vmem %s0, 18
    %v84 = vld [vmem:[%s83] sm:$0x1]
    %85 = vrot.lane.b32.xlu0 %v84, 72
    %v86 = vpop.permute.xlu0 %85
    %vm87 = vcmask 622144
    %88 = vst.msk [vmem:[#allocation0] sm:$0x1] %vm87, %v86
    %s89 = scalar_lea.vmem %s0, 17
    %v90 = vld [vmem:[%s89] sm:$0x1]
    %91 = vrot.lane.b32.xlu0 %v90, 68
    %v92 = vpop.permute.xlu0 %91
    %vm93 = vcmask 589344
    %94 = vst.msk [vmem:[#allocation0] sm:$0x1] %vm93, %v92
    %s95 = scalar_lea.vmem %s0, 16
    %v96 = vld [vmem:[%s95] sm:$0x1]
    %97 = vrot.lane.b32.xlu0 %v96, 64
    %v98 = vpop.permute.xlu0 %97
    %vm99 = vcmask 556544
    %100 = vst.msk [vmem:[#allocation0] sm:$0x1] %vm99, %v98
    %s101 = scalar_lea.vmem %s0, 15
    %v102 = vld [vmem:[%s101] sm:$0x1]
    %103 = vrot.lane.b32.xlu0 %v102, 60
    %v104 = vpop.permute.xlu0 %103
    %vm105 = vcmask 523744
    %106 = vst.msk [vmem:[#allocation0] sm:$0x1] %vm105, %v104
    %s107 = scalar_lea.vmem %s0, 14
    %v108 = vld [vmem:[%s107] sm:$0x1]
    %109 = vrot.lane.b32.xlu0 %v108, 56
    %v110 = vpop.permute.xlu0 %109
    %vm111 = vcmask 490944
    %112 = vst.msk [vmem:[#allocation0] sm:$0x1] %vm111, %v110
    %s113 = scalar_lea.vmem %s0, 13
    %v114 = vld [vmem:[%s113] sm:$0x1]
    %115 = vrot.lane.b32.xlu0 %v114, 52
    %v116 = vpop.permute.xlu0 %115
    %vm117 = vcmask 458144
    %118 = vst.msk [vmem:[#allocation0] sm:$0x1] %vm117, %v116
    %s119 = scalar_lea.vmem %s0, 12
    %v120 = vld [vmem:[%s119] sm:$0x1]
    %121 = vrot.lane.b32.xlu0 %v120, 48
    %v122 = vpop.permute.xlu0 %121
    %vm123 = vcmask 425344
    %124 = vst.msk [vmem:[#allocation0] sm:$0x1] %vm123, %v122
    %s125 = scalar_lea.vmem %s0, 11
    %v126 = vld [vmem:[%s125] sm:$0x1]
    %127 = vrot.lane.b32.xlu0 %v126, 44
    %v128 = vpop.permute.xlu0 %127
    %vm129 = vcmask 392544
    %130 = vst.msk [vmem:[#allocation0] sm:$0x1] %vm129, %v128
    %s131 = scalar_lea.vmem %s0, 10
    %v132 = vld [vmem:[%s131] sm:$0x1]
    %133 = vrot.lane.b32.xlu0 %v132, 40
    %v134 = vpop.permute.xlu0 %133
    %vm135 = vcmask 359744
    %136 = vst.msk [vmem:[#allocation0] sm:$0x1] %vm135, %v134
    %s137 = scalar_lea.vmem %s0, 9
    %v138 = vld [vmem:[%s137] sm:$0x1]
    %139 = vrot.lane.b32.xlu0 %v138, 36
    %v140 = vpop.permute.xlu0 %139
    %vm141 = vcmask 326944
    %142 = vst.msk [vmem:[#allocation0] sm:$0x1] %vm141, %v140
    %s143 = scalar_lea.vmem %s0, 8
    %v144 = vld [vmem:[%s143] sm:$0x1]
    %145 = vrot.lane.b32.xlu0 %v144, 32
    %v146 = vpop.permute.xlu0 %145
    %vm147 = vcmask 294144
    %148 = vst.msk [vmem:[#allocation0] sm:$0x1] %vm147, %v146
    %s149 = scalar_lea.vmem %s0, 7
    %v150 = vld [vmem:[%s149] sm:$0x1]
    %151 = vrot.lane.b32.xlu0 %v150, 28
    %v152 = vpop.permute.xlu0 %151
    %vm153 = vcmask 261344
    %154 = vst.msk [vmem:[#allocation0] sm:$0x1] %vm153, %v152
    %s155 = scalar_lea.vmem %s0, 6
    %v156 = vld [vmem:[%s155] sm:$0x1]
    %157 = vrot.lane.b32.xlu0 %v156, 24
    %v158 = vpop.permute.xlu0 %157
    %vm159 = vcmask 228544
    %160 = vst.msk [vmem:[#allocation0] sm:$0x1] %vm159, %v158
    %s161 = scalar_lea.vmem %s0, 5
    %v162 = vld [vmem:[%s161] sm:$0x1]
    %163 = vrot.lane.b32.xlu0 %v162, 20
    %v164 = vpop.permute.xlu0 %163
    %vm165 = vcmask 195744
    %166 = vst.msk [vmem:[#allocation0] sm:$0x1] %vm165, %v164
    %s167 = scalar_lea.vmem %s0, 4
    %v168 = vld [vmem:[%s167] sm:$0x1]
    %169 = vrot.lane.b32.xlu0 %v168, 16
    %v170 = vpop.permute.xlu0 %169
    %vm171 = vcmask 162944
    %172 = vst.msk [vmem:[#allocation0] sm:$0x1] %vm171, %v170
    %s173 = scalar_lea.vmem %s0, 3
    %v174 = vld [vmem:[%s173] sm:$0x1]
    %175 = vrot.lane.b32.xlu0 %v174, 12
    %v176 = vpop.permute.xlu0 %175
    %vm177 = vcmask 130144
    %178 = vst.msk [vmem:[#allocation0] sm:$0x1] %vm177, %v176
    %s179 = scalar_lea.vmem %s0, 2
    %v180 = vld [vmem:[%s179] sm:$0x1]
    %181 = vrot.lane.b32.xlu0 %v180, 8
    %v182 = vpop.permute.xlu0 %181
    %vm183 = vcmask 97344
    %184 = vst.msk [vmem:[#allocation0] sm:$0x1] %vm183, %v182
    %s185 = scalar_lea.vmem %s0, 1
    %v186 = vld [vmem:[%s185] sm:$0x1]
    %187 = vrot.lane.b32.xlu0 %v186, 4
    %v188 = vpop.permute.xlu0 %187
    %vm189 = vcmask 64544
    %190 = vst.msk [vmem:[#allocation0] sm:$0x1] %vm189, %v188
    %s192 = ssub.s32 2, 1
    %v193 = vld [vmem:[#allocation0] sm:%s192]
    %s195 = ssub.s32 2, 1
    %196 = vst [vmem:[%s1] sm:%s195] %v193

// kernel: tile.23
$region0: #{tile.23}
  #allocation0 [shape = 's32[1]{0}', space=sflag, size = 0x4, scoped, tag = 'scoped memory for tile.23']
  %s0 = inlined_call_operand.vmem [shape: f32[8], index: 0, kind: input, shape index: {}]
  %s1 = inlined_call_operand.vmem [shape: f32[16,8], index: 1, kind: output, shape index: {}]
  // Predicated region
  $region2: #{tile.23} parent=0 // pred_check
    _
  $region3: #{tile.23} parent=0 // pred_check_branch
    %3 = sbr.rel (0) target = $region5
  $region4: #{tile.23} parent=0 // pred_region
    _
  $region5: #{tile.23} parent=0 // pred_fallthru
    _
  %v4 = vld [vmem:[%s0] ss:$0 sm:$0xff]
  %5 = vst [vmem:[%s1] sm:$0xff] %v4
  %s6 = scalar_lea.vmem %s1, 8
  %7 = vst [vmem:[%s6] sm:$0xff] %v4

// kernel: tile.24
$region0: #{tile.24}
  %s0 = inlined_call_operand.vmem [shape: f32[16,8], index: 0, kind: input, shape index: {}]
  %s1 = inlined_call_operand.vmem [shape: f32[1,128], index: 1, kind: output, shape index: {}]
  $region1: #{tile.24} parent=0
    #allocation0 [shape = 'u8[4096]{0}', space=vmem, size = 0x1000, scoped, tag = 'scoped mem for output reshape']
    %v2 = vld [vmem:[%s0] sm:$0x1]
    %vm3 = vcmask 64512
    %4 = vst.msk [vmem:[#allocation0] sm:$0x1] %vm3, %v2
    %s5 = scalar_lea.vmem %s0, 15
    %v6 = vld [vmem:[%s5] sm:$0x1]
    %7 = vrot.lane.b32.xlu0 %v6, 120
    %v8 = vpop.permute.xlu0 %7
    %vm9 = vcmask 1048512
    %10 = vst.msk [vmem:[#allocation0] sm:$0x1] %vm9, %v8
    %s11 = scalar_lea.vmem %s0, 14
    %v12 = vld [vmem:[%s11] sm:$0x1]
    %13 = vrot.lane.b32.xlu0 %v12, 112
    %v14 = vpop.permute.xlu0 %13
    %vm15 = vcmask 982912
    %16 = vst.msk [vmem:[#allocation0] sm:$0x1] %vm15, %v14
    %s17 = scalar_lea.vmem %s0, 13
    %v18 = vld [vmem:[%s17] sm:$0x1]
    %19 = vrot.lane.b32.xlu0 %v18, 104
    %v20 = vpop.permute.xlu0 %19
    %vm21 = vcmask 917312
    %22 = vst.msk [vmem:[#allocation0] sm:$0x1] %vm21, %v20
    %s23 = scalar_lea.vmem %s0, 12
    %v24 = vld [vmem:[%s23] sm:$0x1]
    %25 = vrot.lane.b32.xlu0 %v24, 96
    %v26 = vpop.permute.xlu0 %25
    %vm27 = vcmask 851712
    %28 = vst.msk [vmem:[#allocation0] sm:$0x1] %vm27, %v26
    %s29 = scalar_lea.vmem %s0, 11
    %v30 = vld [vmem:[%s29] sm:$0x1]
    %31 = vrot.lane.b32.xlu0 %v30, 88
    %v32 = vpop.permute.xlu0 %31
    %vm33 = vcmask 786112
    %34 = vst.msk [vmem:[#allocation0] sm:$0x1] %vm33, %v32
    %s35 = scalar_lea.vmem %s0, 10
    %v36 = vld [vmem:[%s35] sm:$0x1]
    %37 = vrot.lane.b32.xlu0 %v36, 80
    %v38 = vpop.permute.xlu0 %37
    %vm39 = vcmask 720512
    %40 = vst.msk [vmem:[#allocation0] sm:$0x1] %vm39, %v38
    %s41 = scalar_lea.vmem %s0, 9
    %v42 = vld [vmem:[%s41] sm:$0x1]
    %43 = vrot.lane.b32.xlu0 %v42, 72
    %v44 = vpop.permute.xlu0 %43
    %vm45 = vcmask 654912
    %46 = vst.msk [vmem:[#allocation0] sm:$0x1] %vm45, %v44
    %s47 = scalar_lea.vmem %s0, 8
    %v48 = vld [vmem:[%s47] sm:$0x1]
    %49 = vrot.lane.b32.xlu0 %v48, 64
    %v50 = vpop.permute.xlu0 %49
    %vm51 = vcmask 589312
    %52 = vst.msk [vmem:[#allocation0] sm:$0x1] %vm51, %v50
    %s53 = scalar_lea.vmem %s0, 7
    %v54 = vld [vmem:[%s53] sm:$0x1]
    %55 = vrot.lane.b32.xlu0 %v54, 56
    %v56 = vpop.permute.xlu0 %55
    %vm57 = vcmask 523712
    %58 = vst.msk [vmem:[#allocation0] sm:$0x1] %vm57, %v56
    %s59 = scalar_lea.vmem %s0, 6
    %v60 = vld [vmem:[%s59] sm:$0x1]
    %61 = vrot.lane.b32.xlu0 %v60, 48
    %v62 = vpop.permute.xlu0 %61
    %vm63 = vcmask 458112
    %64 = vst.msk [vmem:[#allocation0] sm:$0x1] %vm63, %v62
    %s65 = scalar_lea.vmem %s0, 5
    %v66 = vld [vmem:[%s65] sm:$0x1]
    %67 = vrot.lane.b32.xlu0 %v66, 40
    %v68 = vpop.permute.xlu0 %67
    %vm69 = vcmask 392512
    %70 = vst.msk [vmem:[#allocation0] sm:$0x1] %vm69, %v68
    %s71 = scalar_lea.vmem %s0, 4
    %v72 = vld [vmem:[%s71] sm:$0x1]
    %73 = vrot.lane.b32.xlu0 %v72, 32
    %v74 = vpop.permute.xlu0 %73
    %vm75 = vcmask 326912
    %76 = vst.msk [vmem:[#allocation0] sm:$0x1] %vm75, %v74
    %s77 = scalar_lea.vmem %s0, 3
    %v78 = vld [vmem:[%s77] sm:$0x1]
    %79 = vrot.lane.b32.xlu0 %v78, 24
    %v80 = vpop.permute.xlu0 %79
    %vm81 = vcmask 261312
    %82 = vst.msk [vmem:[#allocation0] sm:$0x1] %vm81, %v80
    %s83 = scalar_lea.vmem %s0, 2
    %v84 = vld [vmem:[%s83] sm:$0x1]
    %85 = vrot.lane.b32.xlu0 %v84, 16
    %v86 = vpop.permute.xlu0 %85
    %vm87 = vcmask 195712
    %88 = vst.msk [vmem:[#allocation0] sm:$0x1] %vm87, %v86
    %s89 = scalar_lea.vmem %s0, 1
    %v90 = vld [vmem:[%s89] sm:$0x1]
    %91 = vrot.lane.b32.xlu0 %v90, 8
    %v92 = vpop.permute.xlu0 %91
    %vm93 = vcmask 130112
    %94 = vst.msk [vmem:[#allocation0] sm:$0x1] %vm93, %v92
    %s96 = ssub.s32 2, 1
    %v97 = vld [vmem:[#allocation0] sm:%s96]
    %s99 = ssub.s32 2, 1
    %100 = vst [vmem:[%s1] sm:%s99] %v97

// kernel: upblock_forward.1
$region0: #{upblock_forward.1}
  #allocation0 [shape = 'u32[]', space=smem, size = 0x4, offset = 0x4, fixed_abs, tag = 'smem constant byte address 0x4 - core index']
  #allocation1 [shape = 'u32[72,128]{1,0:T(1,128)}', space=vmem, size = 0x9000, scoped, tag = 'internal scratch']
  %s0 = inlined_call_operand.vmem [shape: bf16[2,2,12,144], index: 0, kind: input, shape index: {}]
  %s1 = inlined_call_operand.vmem [shape: bf16[3,144,128], index: 1, kind: input, shape index: {}]
  %s2 = inlined_call_operand.vmem [shape: bf16[4,128,128], index: 2, kind: input, shape index: {}]
  %s3 = inlined_call_operand.vmem [shape: f32[1,128], index: 3, kind: input, shape index: {}]
  %s4 = inlined_call_operand.vmem [shape: f32[1,128], index: 4, kind: input, shape index: {}]
  %s5 = inlined_call_operand.vmem [shape: f32[1,128], index: 5, kind: input, shape index: {}]
  %s6 = inlined_call_operand.vmem [shape: f32[1,128], index: 6, kind: input, shape index: {}]
  %s7 = inlined_call_operand.vmem [shape: f32[2,2,16,128], index: 7, kind: output, shape index: {}]
  %s8 = sld [smem:[#allocation0]]
  $region95: #{upblock_forward.1} parent=0
    _
  %s10 = ssub.s32 1, %s8
  %s11 = scalar_select 0, %s10, %s8
  $region1: #{upblock_forward.1} parent=0
    #allocation2 [shape = 'u8[16384]{0}', space=vmem, size = 0x4000, scoped, tag = 'output window, operand 0']
    loop: start=0, step=1, limit=6
    $region2: #{upblock_forward.1} parent=1 // loop_pre_header
      _
    $region3: #{upblock_forward.1} parent=1 // loop_header
      %s13 = sphi 0, %s17
      %p14 = scmp.ge.s32.totalorder %s13, 6
      %s20 = sphi 0, %s32
      %s21 = sphi 0, %s28
      %s22 = sphi 0, %s20
      %s23 = sphi 0, %s21
      %s24 = sphi 0, %s22
      %s25 = sphi 0, %s23
      %s37 = sphi 0, %s39
      %s40 = sphi 0, %s37
      %s41 = sphi 0, %s40
      %s57 = sphi 0, %s41
      %s61 = sphi 0, %s61
      %s63 = sphi 0, %s61
      %s64 = sphi 0, %s63
      %s78 = sphi 0, %s64
      %s82 = sphi 0, %s82
      %s84 = sphi 0, %s82
      %s85 = sphi 0, %s84
      %s99 = sphi 0, %s85
      %s103 = sphi 0, %s103
      %s105 = sphi 0, %s103
      %s106 = sphi 0, %s105
      %s120 = sphi 0, %s106
      %s124 = sphi 0, %s124
      %s126 = sphi 0, %s124
      %s127 = sphi 0, %s126
      %s141 = sphi 0, %s127
      %s145 = sphi 0, %s145
      %s147 = sphi 0, %s145
      %s148 = sphi 0, %s147
      %s162 = sphi 0, %s148
      %s166 = sphi 0, %s166
      %s168 = sphi 0, %s166
      %s169 = sphi 0, %s168
      %s183 = sphi 0, %s169
      %s191 = sphi 0, %s193
      %s194 = sphi 0, %s191
      %s195 = sphi 0, %s194
      %s211 = sphi 0, %s195
    $region4: #{upblock_forward.1} parent=1 // loop_header_branch
      %16 = sbr.rel (%p14) target = $region8
    $region5: #{upblock_forward.1} parent=1 // loop_body
      %s18 = ssub.s32 %s13, 1
      %s19 = ssub.s32 %s13, 2
      %s26 = sadd.s32 1, %s21
      %p27 = scmp.ge.s32.totalorder %s26, 2
      %s28 = scalar_select %p27, 0, %s26
      %s29 = sadd.s32 1, %s20
      %s30 = scalar_select %p27, %s29, %s20
      %p31 = scmp.ge.s32.totalorder %s30, 2
      %s32 = scalar_select %p31, 0, %s30
      %s33 = ssub.s32 %s20, %s32
      %s34 = ssub.s32 %s21, %s28
      %s35 = sor.u32 %s33, %s34
      %p36 = scmp.eq.s32.totalorder %s35, 0
      %s38 = sadd.s32 %s37, 1
      %s39 = scalar_select %p36, %s37, %s38
      %p42 = pneg %p36
      %p43 = scmp.eq.s32.totalorder %s13, 3
      %p44 = por %p42, %p43
      %p45 = scmp.ne.s32.totalorder %s37, %s40
      %p46 = scmp.eq.s32.totalorder %s13, 0
      %p47 = por %p45, %p46
      %p48 = scmp.ne.s32.totalorder %s37, %s40
      %p49 = scmp.eq.s32.totalorder %s18, 3
      %p50 = por %p48, %p49
      %p51 = scmp.ne.s32.totalorder %s40, %s41
      %p52 = scmp.eq.s32.totalorder %s18, 0
      %p53 = por %p51, %p52
      %p54 = scmp.ne.s32.totalorder %s40, %s41
      %p55 = scmp.eq.s32.totalorder %s19, 3
      %p56 = por %p54, %p55
      %p58 = scmp.ne.s32.totalorder %s41, %s57
      %p59 = scmp.eq.s32.totalorder %s19, 0
      %p60 = por %p58, %p59
      %s62 = sadd.s32 %s61, 1
      %p65 = scmp.eq.s32.totalorder %s13, 3
      %p66 = scmp.ne.s32.totalorder %s61, %s63
      %p67 = scmp.eq.s32.totalorder %s13, 0
      %p68 = por %p66, %p67
      %p69 = scmp.ne.s32.totalorder %s61, %s63
      %p70 = scmp.eq.s32.totalorder %s18, 3
      %p71 = por %p69, %p70
      %p72 = scmp.ne.s32.totalorder %s63, %s64
      %p73 = scmp.eq.s32.totalorder %s18, 0
      %p74 = por %p72, %p73
      %p75 = scmp.ne.s32.totalorder %s63, %s64
      %p76 = scmp.eq.s32.totalorder %s19, 3
      %p77 = por %p75, %p76
      %p79 = scmp.ne.s32.totalorder %s64, %s78
      %p80 = scmp.eq.s32.totalorder %s19, 0
      %p81 = por %p79, %p80
      %s83 = sadd.s32 %s82, 1
      %p86 = scmp.eq.s32.totalorder %s13, 3
      %p87 = scmp.ne.s32.totalorder %s82, %s84
      %p88 = scmp.eq.s32.totalorder %s13, 0
      %p89 = por %p87, %p88
      %p90 = scmp.ne.s32.totalorder %s82, %s84
      %p91 = scmp.eq.s32.totalorder %s18, 3
      %p92 = por %p90, %p91
      %p93 = scmp.ne.s32.totalorder %s84, %s85
      %p94 = scmp.eq.s32.totalorder %s18, 0
      %p95 = por %p93, %p94
      %p96 = scmp.ne.s32.totalorder %s84, %s85
      %p97 = scmp.eq.s32.totalorder %s19, 3
      %p98 = por %p96, %p97
      %p100 = scmp.ne.s32.totalorder %s85, %s99
      %p101 = scmp.eq.s32.totalorder %s19, 0
      %p102 = por %p100, %p101
      %s104 = sadd.s32 %s103, 1
      %p107 = scmp.eq.s32.totalorder %s13, 3
      %p108 = scmp.ne.s32.totalorder %s103, %s105
      %p109 = scmp.eq.s32.totalorder %s13, 0
      %p110 = por %p108, %p109
      %p111 = scmp.ne.s32.totalorder %s103, %s105
      %p112 = scmp.eq.s32.totalorder %s18, 3
      %p113 = por %p111, %p112
      %p114 = scmp.ne.s32.totalorder %s105, %s106
      %p115 = scmp.eq.s32.totalorder %s18, 0
      %p116 = por %p114, %p115
      %p117 = scmp.ne.s32.totalorder %s105, %s106
      %p118 = scmp.eq.s32.totalorder %s19, 3
      %p119 = por %p117, %p118
      %p121 = scmp.ne.s32.totalorder %s106, %s120
      %p122 = scmp.eq.s32.totalorder %s19, 0
      %p123 = por %p121, %p122
      %s125 = sadd.s32 %s124, 1
      %p128 = scmp.eq.s32.totalorder %s13, 3
      %p129 = scmp.ne.s32.totalorder %s124, %s126
      %p130 = scmp.eq.s32.totalorder %s13, 0
      %p131 = por %p129, %p130
      %p132 = scmp.ne.s32.totalorder %s124, %s126
      %p133 = scmp.eq.s32.totalorder %s18, 3
      %p134 = por %p132, %p133
      %p135 = scmp.ne.s32.totalorder %s126, %s127
      %p136 = scmp.eq.s32.totalorder %s18, 0
      %p137 = por %p135, %p136
      %p138 = scmp.ne.s32.totalorder %s126, %s127
      %p139 = scmp.eq.s32.totalorder %s19, 3
      %p140 = por %p138, %p139
      %p142 = scmp.ne.s32.totalorder %s127, %s141
      %p143 = scmp.eq.s32.totalorder %s19, 0
      %p144 = por %p142, %p143
      %s146 = sadd.s32 %s145, 1
      %p149 = scmp.eq.s32.totalorder %s13, 3
      %p150 = scmp.ne.s32.totalorder %s145, %s147
      %p151 = scmp.eq.s32.totalorder %s13, 0
      %p152 = por %p150, %p151
      %p153 = scmp.ne.s32.totalorder %s145, %s147
      %p154 = scmp.eq.s32.totalorder %s18, 3
      %p155 = por %p153, %p154
      %p156 = scmp.ne.s32.totalorder %s147, %s148
      %p157 = scmp.eq.s32.totalorder %s18, 0
      %p158 = por %p156, %p157
      %p159 = scmp.ne.s32.totalorder %s147, %s148
      %p160 = scmp.eq.s32.totalorder %s19, 3
      %p161 = por %p159, %p160
      %p163 = scmp.ne.s32.totalorder %s148, %s162
      %p164 = scmp.eq.s32.totalorder %s19, 0
      %p165 = por %p163, %p164
      %s167 = sadd.s32 %s166, 1
      %p170 = scmp.eq.s32.totalorder %s13, 3
      %p171 = scmp.ne.s32.totalorder %s166, %s168
      %p172 = scmp.eq.s32.totalorder %s13, 0
      %p173 = por %p171, %p172
      %p174 = scmp.ne.s32.totalorder %s166, %s168
      %p175 = scmp.eq.s32.totalorder %s18, 3
      %p176 = por %p174, %p175
      %p177 = scmp.ne.s32.totalorder %s168, %s169
      %p178 = scmp.eq.s32.totalorder %s18, 0
      %p179 = por %p177, %p178
      %p180 = scmp.ne.s32.totalorder %s168, %s169
      %p181 = scmp.eq.s32.totalorder %s19, 3
      %p182 = por %p180, %p181
      %p184 = scmp.ne.s32.totalorder %s169, %s183
      %p185 = scmp.eq.s32.totalorder %s19, 0
      %p186 = por %p184, %p185
      %s187 = ssub.s32 %s20, %s32
      %s188 = ssub.s32 %s21, %s28
      %s189 = sor.u32 %s187, %s188
      %p190 = scmp.eq.s32.totalorder %s189, 0
      %s192 = sadd.s32 %s191, 1
      %s193 = scalar_select %p190, %s191, %s192
      %p196 = pneg %p190
      %p197 = scmp.eq.s32.totalorder %s13, 3
      %p198 = por %p196, %p197
      %p199 = scmp.ne.s32.totalorder %s191, %s194
      %p200 = scmp.eq.s32.totalorder %s13, 0
      %p201 = por %p199, %p200
      %p202 = scmp.ne.s32.totalorder %s191, %s194
      %p203 = scmp.eq.s32.totalorder %s18, 3
      %p204 = por %p202, %p203
      %p205 = scmp.ne.s32.totalorder %s194, %s195
      %p206 = scmp.eq.s32.totalorder %s18, 0
      %p207 = por %p205, %p206
      %p208 = scmp.ne.s32.totalorder %s194, %s195
      %p209 = scmp.eq.s32.totalorder %s19, 3
      %p210 = por %p208, %p209
      %p212 = scmp.ne.s32.totalorder %s195, %s211
      %p213 = scmp.eq.s32.totalorder %s19, 0
      %p214 = por %p212, %p213
      %p215 = scmp.le.s32.totalorder 1, %s13
      %p216 = scmp.lt.s32.totalorder %s13, 5
      %p217 = pnand %p215, %p216
      %p218 = pneg %p217
      // Predicated region
      $region9: #{upblock_forward.1} parent=5 // pred_check
        _
      $region10: #{upblock_forward.1} parent=5 // pred_check_branch
        %220 = sbr.rel (%p217) target = $region12
      $region11: #{upblock_forward.1} parent=5 // pred_region
        %s221 = ssub.s32 %s13, 1
        // Predicated region
        $region13: #{upblock_forward.1} parent=11 // pred_check
          %p222 = pneg %p74
        $region14: #{upblock_forward.1} parent=11 // pred_check_branch
          %224 = sbr.rel (%p222) target = $region16
        $region15: #{upblock_forward.1} parent=11 // pred_region
          _
        $region16: #{upblock_forward.1} parent=11 // pred_fallthru
          _
        // Predicated region
        $region17: #{upblock_forward.1} parent=11 // pred_check
          %p225 = pneg %p95
        $region18: #{upblock_forward.1} parent=11 // pred_check_branch
          %227 = sbr.rel (%p225) target = $region20
        $region19: #{upblock_forward.1} parent=11 // pred_region
          _
        $region20: #{upblock_forward.1} parent=11 // pred_fallthru
          _
        // Predicated region
        $region21: #{upblock_forward.1} parent=11 // pred_check
          %p228 = pneg %p116
        $region22: #{upblock_forward.1} parent=11 // pred_check_branch
          %230 = sbr.rel (%p228) target = $region24
        $region23: #{upblock_forward.1} parent=11 // pred_region
          _
        $region24: #{upblock_forward.1} parent=11 // pred_fallthru
          _
        // Predicated region
        $region25: #{upblock_forward.1} parent=11 // pred_check
          %p231 = pneg %p137
        $region26: #{upblock_forward.1} parent=11 // pred_check_branch
          %233 = sbr.rel (%p231) target = $region28
        $region27: #{upblock_forward.1} parent=11 // pred_region
          _
        $region28: #{upblock_forward.1} parent=11 // pred_fallthru
          _
        // Predicated region
        $region29: #{upblock_forward.1} parent=11 // pred_check
          %p234 = pneg %p158
        $region30: #{upblock_forward.1} parent=11 // pred_check_branch
          %236 = sbr.rel (%p234) target = $region32
        $region31: #{upblock_forward.1} parent=11 // pred_region
          _
        $region32: #{upblock_forward.1} parent=11 // pred_fallthru
          _
        // Predicated region
        $region33: #{upblock_forward.1} parent=11 // pred_check
          %p237 = pneg %p179
        $region34: #{upblock_forward.1} parent=11 // pred_check_branch
          %239 = sbr.rel (%p237) target = $region36
        $region35: #{upblock_forward.1} parent=11 // pred_region
          _
        $region36: #{upblock_forward.1} parent=11 // pred_fallthru
          _
      $region12: #{upblock_forward.1} parent=5 // pred_fallthru
        _
      %p240 = scmp.lt.s32.totalorder %s13, 4
      // Predicated region
      $region37: #{upblock_forward.1} parent=5 // pred_check
        %p241 = pneg %p240
      $region38: #{upblock_forward.1} parent=5 // pred_check_branch
        %243 = sbr.rel (%p241) target = $region40
      $region39: #{upblock_forward.1} parent=5 // pred_region
        // Predicated region
        $region41: #{upblock_forward.1} parent=39 // pred_check
          %p244 = pneg %p47
        $region42: #{upblock_forward.1} parent=39 // pred_check_branch
          %246 = sbr.rel (%p244) target = $region44
        $region43: #{upblock_forward.1} parent=39 // pred_region
          %p247 = scmp.lt.s32.totalorder %s20, 1
          %s248 = scalar_select %p247, %s20, 1
          %p249 = scmp.lt.s32.totalorder %s21, 1
          %s250 = scalar_select %p249, %s21, 1
          %s251 = smul.addr %s250, 4
          %s252 = smul.addr %s248, 8
          %s253 = sadd.s32 %s251, %s252
          %s254 = smul.addr %s253, 4
          %s255 = scalar_lea.vmem %s0, %s254
        $region44: #{upblock_forward.1} parent=39 // pred_fallthru
          _
      $region40: #{upblock_forward.1} parent=5 // pred_fallthru
        _
      %p256 = scmp.le.s32.totalorder 1, %s13
      %p257 = scmp.lt.s32.totalorder %s13, 5
      %p258 = pnand %p256, %p257
      %p259 = pneg %p258
      // Predicated region
      $region45: #{upblock_forward.1} parent=5 // pred_check
        _
      $region46: #{upblock_forward.1} parent=5 // pred_check_branch
        %261 = sbr.rel (%p258) target = $region48
      $region47: #{upblock_forward.1} parent=5 // pred_region
        %s262 = ssub.s32 %s13, 1
        %p263 = scmp.lt.s32.totalorder %s22, 1
        %s264 = scalar_select %p263, %s22, 1
        %p265 = scmp.lt.s32.totalorder %s23, 1
        %s266 = scalar_select %p265, %s23, 1
        %s267 = smul.addr %s266, 4
        %s268 = smul.addr %s264, 8
        %s269 = sadd.s32 %s267, %s268
        %s270 = smul.addr %s269, 4
        %s271 = scalar_lea.vmem %s0, %s270
        %p272 = pneg %p53
        %p273 = pneg %p50
        %p274 = pneg %p74
        %p275 = pneg %p71
        %p276 = pneg %p95
        %p277 = pneg %p92
        %p278 = pneg %p116
        %p279 = pneg %p113
        %p280 = pneg %p137
        %p281 = pneg %p134
        %p282 = pneg %p158
        %p283 = pneg %p155
        %p284 = pneg %p179
        %p285 = pneg %p176
        %p286 = pneg %p207
        %p287 = pneg %p204
        %s288 = sand.u32 %s194, 1
        %s289 = sand.u32 %s194, 1
        %s290 = smul.addr %s289, 16
        %s291 = scalar_lea.vmem [#allocation2], %s290
        %p292 = scmp.lt.s32.totalorder %s22, 1
        %s293 = scalar_select %p292, %s22, 1
        %p294 = scmp.lt.s32.totalorder %s23, 1
        %s295 = scalar_select %p294, %s23, 1
        %s296 = smul.addr %s295, 4
        %s297 = smul.addr %s293, 8
        %s298 = sadd.s32 %s296, %s297
        %s299 = smul.addr %s298, 4
        %s300 = scalar_lea.vmem %s0, %s299
        %v302 = vld [vmem:[%s300] sm:$0xff]
        %v303 = vld [vmem:[%s300 + $0x8] sm:$0x11]
        %v304 = vld [vmem:[%s1] sm:$0xf]
        %v305 = vld [vmem:[%s1 + $0x4] sm:$0xf]
        %v306 = vld [vmem:[%s1 + $0x8] sm:$0xf]
        %v307 = vld [vmem:[%s1 + $0xc] sm:$0xf]
        %v308 = vld [vmem:[%s1 + $0x10] sm:$0xf]
        %v309 = vld [vmem:[%s1 + $0x14] sm:$0xf]
        %v310 = vld [vmem:[%s1 + $0x18] sm:$0xf]
        %v311 = vld [vmem:[%s1 + $0x1c] sm:$0xf]
        %v312 = vld [vmem:[%s1 + $0x20] sm:$0xf]
        %v313 = vld [vmem:[%s1 + $0x24] sm:$0xf]
        %v314 = vld [vmem:[%s1 + $0x28] sm:$0xf]
        %v315 = vld [vmem:[%s1 + $0x2c] sm:$0xf]
        %v316 = vld [vmem:[%s1 + $0x30] sm:$0xf]
        %v317 = vld [vmem:[%s1 + $0x34] sm:$0xf]
        %v318 = vld [vmem:[%s1 + $0x38] sm:$0xf]
        %v319 = vld [vmem:[%s1 + $0x3c] sm:$0xf]
        %v320 = vld [vmem:[%s1 + $0x40] sm:$0xf]
        %v321 = vld [vmem:[%s1 + $0x44] sm:$0xf]
        %v322 = vld [vmem:[%s300 + $0x8] sm:$0x33]
        %s323 = scalar_lea.vmem %s1, 72
        %v324 = vld [vmem:[%s323] sm:$0xf]
        %v325 = vld [vmem:[%s323 + $0x4] sm:$0xf]
        %v326 = vld [vmem:[%s323 + $0x8] sm:$0xf]
        %v327 = vld [vmem:[%s323 + $0xc] sm:$0xf]
        %v328 = vld [vmem:[%s323 + $0x10] sm:$0xf]
        %v329 = vld [vmem:[%s323 + $0x14] sm:$0xf]
        %v330 = vld [vmem:[%s323 + $0x18] sm:$0xf]
        %v331 = vld [vmem:[%s323 + $0x1c] sm:$0xf]
        %v332 = vld [vmem:[%s323 + $0x20] sm:$0xf]
        %v333 = vld [vmem:[%s323 + $0x24] sm:$0xf]
        %v334 = vld [vmem:[%s323 + $0x28] sm:$0xf]
        %v335 = vld [vmem:[%s323 + $0x2c] sm:$0xf]
        %v336 = vld [vmem:[%s323 + $0x30] sm:$0xf]
        %v337 = vld [vmem:[%s323 + $0x34] sm:$0xf]
        %v338 = vld [vmem:[%s323 + $0x38] sm:$0xf]
        %v339 = vld [vmem:[%s323 + $0x3c] sm:$0xf]
        %v340 = vld [vmem:[%s323 + $0x40] sm:$0xf]
        %v341 = vld [vmem:[%s323 + $0x44] sm:$0xf]
        %v344 = vunpack.c.l.b16 %v302
        %v345 = vunpack.c.h.b16 %v302
        %v346 = vunpack.c.l.b16 %v322
        %v347 = vunpack.c.h.b16 %v322
        %v348 = vpack.c.b16 %v346, %v344
        %v349 = vpack.c.b16 %v347, %v345
        %v351 = vshrl.u32 %v348, 16
        %v353 = vshll.u32 %v348, 16
        %v355 = vrot.slane %v353, 1
        %v356 = vor.u32 %v351, %v355
        %v358 = vshrl.u32 %v349, 16
        %v360 = vshll.u32 %v349, 16
        %v362 = vrot.slane %v360, 1
        %v363 = vor.u32 %v358, %v362
        %v383 = vunpack.c.l.b16 %v324
        %v384 = vunpack.c.l.b16 %v325
        %v385 = vunpack.c.l.b16 %v326
        %v386 = vunpack.c.l.b16 %v327
        %v387 = vunpack.c.l.b16 %v328
        %v388 = vunpack.c.l.b16 %v329
        %v389 = vunpack.c.l.b16 %v330
        %v390 = vunpack.c.l.b16 %v331
        %v391 = vunpack.c.l.b16 %v332
        %v392 = vunpack.c.l.b16 %v333
        %v393 = vunpack.c.l.b16 %v334
        %v394 = vunpack.c.l.b16 %v335
        %v395 = vunpack.c.l.b16 %v336
        %v396 = vunpack.c.l.b16 %v337
        %v397 = vunpack.c.l.b16 %v338
        %v398 = vunpack.c.l.b16 %v339
        %v399 = vunpack.c.l.b16 %v340
        %v400 = vunpack.c.l.b16 %v341
        %v401 = vpack.c.b16 %v384, %v383
        %v402 = vpack.c.b16 %v386, %v385
        %v403 = vpack.c.b16 %v388, %v387
        %v404 = vpack.c.b16 %v390, %v389
        %v405 = vpack.c.b16 %v392, %v391
        %v406 = vpack.c.b16 %v394, %v393
        %v407 = vpack.c.b16 %v396, %v395
        %v408 = vpack.c.b16 %v398, %v397
        %v409 = vpack.c.b16 %v400, %v399
        %vm419 = vcmask 130048
        %v421 = vsel %vm419, %v363, 0
        %423 = vmatpush.bf16.msra.mxu0 %v408
        %424 = vmatpush.bf16.msra.mxu0 %v407
        %425 = vmatpush.bf16.msra.mxu0 %v406
        %426 = vmatpush.bf16.msra.mxu0 %v405
        %427 = vmatpush.bf16.msra.mxu0 %v404
        %428 = vmatpush.bf16.msra.mxu0 %v403
        %429 = vmatpush.bf16.msra.mxu0 %v402
        %430 = vmatpush.bf16.msra.mxu0 %v401
        %431 = vmatmul.bf16.gmra.mxu0 %v356
        %v432 = vpop.f32.mrf.mxu0
        %v433 = vadd.f32 0.0, %v432
        %v434 = vpop.f32.mrf.mxu0
        %v435 = vadd.f32 0.0, %v434
        %436 = vdwg.mxu0
        %437 = vmatpush.bf16.msra.mxu0 0
        %438 = vmatpush.bf16.msra.mxu0 0
        %439 = vmatpush.bf16.msra.mxu0 0
        %440 = vmatpush.bf16.msra.mxu0 0
        %441 = vmatpush.bf16.msra.mxu0 0
        %442 = vmatpush.bf16.msra.mxu0 0
        %443 = vmatpush.bf16.msra.mxu0 0
        %444 = vmatpush.bf16.msra.mxu0 %v409
        %445 = vmatmul.bf16.gmra.mxu0 %v421
        %v446 = vpop.f32.mrf.mxu0
        %v447 = vadd.f32 %v433, %v446
        %v448 = vpop.f32.mrf.mxu0
        %v449 = vadd.f32 %v435, %v448
        %450 = vdwg.mxu0
        %v452 = vunpack.c.l.b16 %v303
        %v453 = vunpack.c.h.b16 %v303
        %v454 = vpack.c.b16 %v452, %v344
        %v455 = vpack.c.b16 %v453, %v345
        %v475 = vunpack.c.l.b16 %v304
        %v476 = vunpack.c.l.b16 %v305
        %v477 = vunpack.c.l.b16 %v306
        %v478 = vunpack.c.l.b16 %v307
        %v479 = vunpack.c.l.b16 %v308
        %v480 = vunpack.c.l.b16 %v309
        %v481 = vunpack.c.l.b16 %v310
        %v482 = vunpack.c.l.b16 %v311
        %v483 = vunpack.c.l.b16 %v312
        %v484 = vunpack.c.l.b16 %v313
        %v485 = vunpack.c.l.b16 %v314
        %v486 = vunpack.c.l.b16 %v315
        %v487 = vunpack.c.l.b16 %v316
        %v488 = vunpack.c.l.b16 %v317
        %v489 = vunpack.c.l.b16 %v318
        %v490 = vunpack.c.l.b16 %v319
        %v491 = vunpack.c.l.b16 %v320
        %v492 = vunpack.c.l.b16 %v321
        %v493 = vpack.c.b16 %v476, %v475
        %v494 = vpack.c.b16 %v478, %v477
        %v495 = vpack.c.b16 %v480, %v479
        %v496 = vpack.c.b16 %v482, %v481
        %v497 = vpack.c.b16 %v484, %v483
        %v498 = vpack.c.b16 %v486, %v485
        %v499 = vpack.c.b16 %v488, %v487
        %v500 = vpack.c.b16 %v490, %v489
        %v501 = vpack.c.b16 %v492, %v491
        %v512 = vsel %vm419, %v455, 0
        %514 = vmatpush.bf16.msra.mxu0 %v500
        %515 = vmatpush.bf16.msra.mxu0 %v499
        %516 = vmatpush.bf16.msra.mxu0 %v498
        %517 = vmatpush.bf16.msra.mxu0 %v497
        %518 = vmatpush.bf16.msra.mxu0 %v496
        %519 = vmatpush.bf16.msra.mxu0 %v495
        %520 = vmatpush.bf16.msra.mxu0 %v494
        %521 = vmatpush.bf16.msra.mxu0 %v493
        %522 = vmatmul.bf16.gmra.mxu0 %v454
        %v523 = vpop.f32.mrf.mxu0
        %v524 = vadd.f32 %v447, %v523
        %v525 = vpop.f32.mrf.mxu0
        %v526 = vadd.f32 %v449, %v525
        %527 = vdwg.mxu0
        %528 = vmatpush.bf16.msra.mxu0 0
        %529 = vmatpush.bf16.msra.mxu0 0
        %530 = vmatpush.bf16.msra.mxu0 0
        %531 = vmatpush.bf16.msra.mxu0 0
        %532 = vmatpush.bf16.msra.mxu0 0
        %533 = vmatpush.bf16.msra.mxu0 0
        %534 = vmatpush.bf16.msra.mxu0 0
        %535 = vmatpush.bf16.msra.mxu0 %v501
        %536 = vmatmul.bf16.gmra.mxu0 %v512
        %v537 = vpop.f32.mrf.mxu0
        %v538 = vadd.f32 %v524, %v537
        %v539 = vpop.f32.mrf.mxu0
        %v540 = vadd.f32 %v526, %v539
        %541 = vdwg.mxu0
        %v542 = vld [vmem:[%s300] sm:$0xee]
        %s543 = scalar_lea.vmem %s1, 144
        %v544 = vld [vmem:[%s543] sm:$0xf]
        %v545 = vld [vmem:[%s543 + $0x4] sm:$0xf]
        %v546 = vld [vmem:[%s543 + $0x8] sm:$0xf]
        %v547 = vld [vmem:[%s543 + $0xc] sm:$0xf]
        %v548 = vld [vmem:[%s543 + $0x10] sm:$0xf]
        %v549 = vld [vmem:[%s543 + $0x14] sm:$0xf]
        %v550 = vld [vmem:[%s543 + $0x18] sm:$0xf]
        %v551 = vld [vmem:[%s543 + $0x1c] sm:$0xf]
        %v552 = vld [vmem:[%s543 + $0x20] sm:$0xf]
        %v553 = vld [vmem:[%s543 + $0x24] sm:$0xf]
        %v554 = vld [vmem:[%s543 + $0x28] sm:$0xf]
        %v555 = vld [vmem:[%s543 + $0x2c] sm:$0xf]
        %v556 = vld [vmem:[%s543 + $0x30] sm:$0xf]
        %v557 = vld [vmem:[%s543 + $0x34] sm:$0xf]
        %v558 = vld [vmem:[%s543 + $0x38] sm:$0xf]
        %v559 = vld [vmem:[%s543 + $0x3c] sm:$0xf]
        %v560 = vld [vmem:[%s543 + $0x40] sm:$0xf]
        %v561 = vld [vmem:[%s543 + $0x44] sm:$0xf]
        %v563 = vunpack.c.l.b16 %v542
        %v564 = vunpack.c.h.b16 %v542
        %v565 = vpack.c.b16 %v346, %v563
        %v566 = vpack.c.b16 %v347, %v564
        %v567 = vrot.slane %v565, 1
        %v568 = vrot.slane %v566, 1
        %v588 = vunpack.c.l.b16 %v544
        %v589 = vunpack.c.l.b16 %v545
        %v590 = vunpack.c.l.b16 %v546
        %v591 = vunpack.c.l.b16 %v547
        %v592 = vunpack.c.l.b16 %v548
        %v593 = vunpack.c.l.b16 %v549
        %v594 = vunpack.c.l.b16 %v550
        %v595 = vunpack.c.l.b16 %v551
        %v596 = vunpack.c.l.b16 %v552
        %v597 = vunpack.c.l.b16 %v553
        %v598 = vunpack.c.l.b16 %v554
        %v599 = vunpack.c.l.b16 %v555
        %v600 = vunpack.c.l.b16 %v556
        %v601 = vunpack.c.l.b16 %v557
        %v602 = vunpack.c.l.b16 %v558
        %v603 = vunpack.c.l.b16 %v559
        %v604 = vunpack.c.l.b16 %v560
        %v605 = vunpack.c.l.b16 %v561
        %v606 = vpack.c.b16 %v589, %v588
        %v607 = vpack.c.b16 %v591, %v590
        %v608 = vpack.c.b16 %v593, %v592
        %v609 = vpack.c.b16 %v595, %v594
        %v610 = vpack.c.b16 %v597, %v596
        %v611 = vpack.c.b16 %v599, %v598
        %v612 = vpack.c.b16 %v601, %v600
        %v613 = vpack.c.b16 %v603, %v602
        %v614 = vpack.c.b16 %v605, %v604
        %v625 = vsel %vm419, %v568, 0
        %627 = vmatpush.bf16.msra.mxu0 %v613
        %628 = vmatpush.bf16.msra.mxu0 %v612
        %629 = vmatpush.bf16.msra.mxu0 %v611
        %630 = vmatpush.bf16.msra.mxu0 %v610
        %631 = vmatpush.bf16.msra.mxu0 %v609
        %632 = vmatpush.bf16.msra.mxu0 %v608
        %633 = vmatpush.bf16.msra.mxu0 %v607
        %634 = vmatpush.bf16.msra.mxu0 %v606
        %635 = vmatmul.bf16.gmra.mxu0 %v567
        %v636 = vpop.f32.mrf.mxu0
        %v637 = vadd.f32 0.0, %v636
        %v638 = vpop.f32.mrf.mxu0
        %v639 = vadd.f32 0.0, %v638
        %640 = vdwg.mxu0
        %641 = vmatpush.bf16.msra.mxu0 0
        %642 = vmatpush.bf16.msra.mxu0 0
        %643 = vmatpush.bf16.msra.mxu0 0
        %644 = vmatpush.bf16.msra.mxu0 0
        %645 = vmatpush.bf16.msra.mxu0 0
        %646 = vmatpush.bf16.msra.mxu0 0
        %647 = vmatpush.bf16.msra.mxu0 0
        %648 = vmatpush.bf16.msra.mxu0 %v614
        %649 = vmatmul.bf16.gmra.mxu0 %v625
        %v650 = vpop.f32.mrf.mxu0
        %v651 = vadd.f32 %v637, %v650
        %v652 = vpop.f32.mrf.mxu0
        %v653 = vadd.f32 %v639, %v652
        %654 = vdwg.mxu0
        %v655 = vadd.f32 %v538, %v651
        %v656 = vadd.f32 %v540, %v653
        %v657 = vld [vmem:[%s3] sm:$0x1]
        %v659 = vperm.slane %v657, 0
        %v661 = vmul.f32 %v655, %v659
        %v662 = vmul.f32 %v656, %v659
        %v663 = vld [vmem:[%s4] sm:$0x1]
        %v665 = vperm.slane %v663, 0
        %v667 = vadd.f32 %v661, %v665
        %v668 = vadd.f32 %v662, %v665
        %v669 = vmax.f32 %v667, 0.0
        %v670 = vmax.f32 %v668, 0.0
        %s671 = smul.u32 %s23, 8
        %v672 = vlaneseq
        %v673 = vshrl.u32 %v672, 7
        %v674 = vadd.s32 %v673, 8
        %v675 = vstv %s671
        %v676 = vadd.s32 %v675, %v673
        %v677 = vadd.s32 %v675, %v674
        %vm678 = vcmp.ge.s32.totalorder %v676, 1
        %vm679 = vcmp.ge.s32.totalorder %v677, 1
        %vm680 = vcmp.le.s32.totalorder %v676, 16
        %vm681 = vcmp.le.s32.totalorder %v677, 16
        %vm682 = vmand %vm678, %vm680
        %vm683 = vmand %vm679, %vm681
        %v684 = vsel %vm682, 1, 0
        %v685 = vsel %vm683, 1, 0
        %vm686 = vcmp.eq.s32.totalorder %v684, 1
        %vm687 = vcmp.eq.s32.totalorder %v685, 1
        %v688 = vsel %vm686, %v669, 0.0
        %v689 = vsel %vm687, %v670, 0.0
        %v690 = vpack.c.bf16 %v688, %v688
        %v691 = vpack.c.bf16 %v689, %v689
        %v692 = vld [vmem:[%s2] sm:$0xf]
        %v693 = vld [vmem:[%s2 + $0x4] sm:$0xf]
        %v694 = vld [vmem:[%s2 + $0x8] sm:$0xf]
        %v695 = vld [vmem:[%s2 + $0xc] sm:$0xf]
        %v696 = vld [vmem:[%s2 + $0x10] sm:$0xf]
        %v697 = vld [vmem:[%s2 + $0x14] sm:$0xf]
        %v698 = vld [vmem:[%s2 + $0x18] sm:$0xf]
        %v699 = vld [vmem:[%s2 + $0x1c] sm:$0xf]
        %v700 = vld [vmem:[%s2 + $0x20] sm:$0xf]
        %v701 = vld [vmem:[%s2 + $0x24] sm:$0xf]
        %v702 = vld [vmem:[%s2 + $0x28] sm:$0xf]
        %v703 = vld [vmem:[%s2 + $0x2c] sm:$0xf]
        %v704 = vld [vmem:[%s2 + $0x30] sm:$0xf]
        %v705 = vld [vmem:[%s2 + $0x34] sm:$0xf]
        %v706 = vld [vmem:[%s2 + $0x38] sm:$0xf]
        %v707 = vld [vmem:[%s2 + $0x3c] sm:$0xf]
        %s708 = scalar_lea.vmem %s2, 64
        %v709 = vld [vmem:[%s708] sm:$0xf]
        %v710 = vld [vmem:[%s708 + $0x4] sm:$0xf]
        %v711 = vld [vmem:[%s708 + $0x8] sm:$0xf]
        %v712 = vld [vmem:[%s708 + $0xc] sm:$0xf]
        %v713 = vld [vmem:[%s708 + $0x10] sm:$0xf]
        %v714 = vld [vmem:[%s708 + $0x14] sm:$0xf]
        %v715 = vld [vmem:[%s708 + $0x18] sm:$0xf]
        %v716 = vld [vmem:[%s708 + $0x1c] sm:$0xf]
        %v717 = vld [vmem:[%s708 + $0x20] sm:$0xf]
        %v718 = vld [vmem:[%s708 + $0x24] sm:$0xf]
        %v719 = vld [vmem:[%s708 + $0x28] sm:$0xf]
        %v720 = vld [vmem:[%s708 + $0x2c] sm:$0xf]
        %v721 = vld [vmem:[%s708 + $0x30] sm:$0xf]
        %v722 = vld [vmem:[%s708 + $0x34] sm:$0xf]
        %v723 = vld [vmem:[%s708 + $0x38] sm:$0xf]
        %v724 = vld [vmem:[%s708 + $0x3c] sm:$0xf]
        %v727 = vunpack.c.l.b16 %v690
        %v728 = vunpack.c.l.b16 %v691
        %v729 = vpack.c.b16 %v728, %v727
        %v731 = vshrl.u32 %v729, 16
        %v733 = vshll.u32 %v729, 16
        %v735 = vrot.slane %v733, 1
        %v736 = vor.u32 %v731, %v735
        %v754 = vunpack.c.l.b16 %v709
        %v755 = vunpack.c.l.b16 %v710
        %v756 = vunpack.c.l.b16 %v711
        %v757 = vunpack.c.l.b16 %v712
        %v758 = vunpack.c.l.b16 %v713
        %v759 = vunpack.c.l.b16 %v714
        %v760 = vunpack.c.l.b16 %v715
        %v761 = vunpack.c.l.b16 %v716
        %v762 = vunpack.c.l.b16 %v717
        %v763 = vunpack.c.l.b16 %v718
        %v764 = vunpack.c.l.b16 %v719
        %v765 = vunpack.c.l.b16 %v720
        %v766 = vunpack.c.l.b16 %v721
        %v767 = vunpack.c.l.b16 %v722
        %v768 = vunpack.c.l.b16 %v723
        %v769 = vunpack.c.l.b16 %v724
        %v770 = vpack.c.b16 %v755, %v754
        %v771 = vpack.c.b16 %v757, %v756
        %v772 = vpack.c.b16 %v759, %v758
        %v773 = vpack.c.b16 %v761, %v760
        %v774 = vpack.c.b16 %v763, %v762
        %v775 = vpack.c.b16 %v765, %v764
        %v776 = vpack.c.b16 %v767, %v766
        %v777 = vpack.c.b16 %v769, %v768
        %786 = vmatpush.bf16.msra.mxu0 %v777
        %787 = vmatpush.bf16.msra.mxu0 %v776
        %788 = vmatpush.bf16.msra.mxu0 %v775
        %789 = vmatpush.bf16.msra.mxu0 %v774
        %790 = vmatpush.bf16.msra.mxu0 %v773
        %791 = vmatpush.bf16.msra.mxu0 %v772
        %792 = vmatpush.bf16.msra.mxu0 %v771
        %793 = vmatpush.bf16.msra.mxu0 %v770
        %794 = vmatmul.bf16.gmra.mxu0 %v736
        %v795 = vpop.f32.mrf.mxu0
        %v796 = vadd.f32 0.0, %v795
        %v797 = vpop.f32.mrf.mxu0
        %798 = vdwg.mxu0
        %v815 = vunpack.c.l.b16 %v692
        %v816 = vunpack.c.l.b16 %v693
        %v817 = vunpack.c.l.b16 %v694
        %v818 = vunpack.c.l.b16 %v695
        %v819 = vunpack.c.l.b16 %v696
        %v820 = vunpack.c.l.b16 %v697
        %v821 = vunpack.c.l.b16 %v698
        %v822 = vunpack.c.l.b16 %v699
        %v823 = vunpack.c.l.b16 %v700
        %v824 = vunpack.c.l.b16 %v701
        %v825 = vunpack.c.l.b16 %v702
        %v826 = vunpack.c.l.b16 %v703
        %v827 = vunpack.c.l.b16 %v704
        %v828 = vunpack.c.l.b16 %v705
        %v829 = vunpack.c.l.b16 %v706
        %v830 = vunpack.c.l.b16 %v707
        %v831 = vpack.c.b16 %v816, %v815
        %v832 = vpack.c.b16 %v818, %v817
        %v833 = vpack.c.b16 %v820, %v819
        %v834 = vpack.c.b16 %v822, %v821
        %v835 = vpack.c.b16 %v824, %v823
        %v836 = vpack.c.b16 %v826, %v825
        %v837 = vpack.c.b16 %v828, %v827
        %v838 = vpack.c.b16 %v830, %v829
        %847 = vmatpush.bf16.msra.mxu0 %v838
        %848 = vmatpush.bf16.msra.mxu0 %v837
        %849 = vmatpush.bf16.msra.mxu0 %v836
        %850 = vmatpush.bf16.msra.mxu0 %v835
        %851 = vmatpush.bf16.msra.mxu0 %v834
        %852 = vmatpush.bf16.msra.mxu0 %v833
        %853 = vmatpush.bf16.msra.mxu0 %v832
        %854 = vmatpush.bf16.msra.mxu0 %v831
        %855 = vmatmul.bf16.gmra.mxu0 %v690
        %v856 = vpop.f32.mrf.mxu0
        %v857 = vadd.f32 %v796, %v856
        %v858 = vpop.f32.mrf.mxu0
        %859 = vdwg.mxu0
        %v860 = vld [vmem:[%s5] sm:$0x1]
        %v862 = vperm.slane %v860, 0
        %v864 = vmul.f32 %v857, %v862
        %v865 = vld [vmem:[%s6] sm:$0x1]
        %v867 = vperm.slane %v865, 0
        %v869 = vadd.f32 %v864, %v867
        %v870 = vmax.f32 %v869, 0.0
        %871 = vst [vmem:[%s291] sm:$0xff] %v870
        %s872 = scalar_lea.vmem %s2, 128
        %v873 = vld [vmem:[%s872] sm:$0xf]
        %v874 = vld [vmem:[%s872 + $0x4] sm:$0xf]
        %v875 = vld [vmem:[%s872 + $0x8] sm:$0xf]
        %v876 = vld [vmem:[%s872 + $0xc] sm:$0xf]
        %v877 = vld [vmem:[%s872 + $0x10] sm:$0xf]
        %v878 = vld [vmem:[%s872 + $0x14] sm:$0xf]
        %v879 = vld [vmem:[%s872 + $0x18] sm:$0xf]
        %v880 = vld [vmem:[%s872 + $0x1c] sm:$0xf]
        %v881 = vld [vmem:[%s872 + $0x20] sm:$0xf]
        %v882 = vld [vmem:[%s872 + $0x24] sm:$0xf]
        %v883 = vld [vmem:[%s872 + $0x28] sm:$0xf]
        %v884 = vld [vmem:[%s872 + $0x2c] sm:$0xf]
        %v885 = vld [vmem:[%s872 + $0x30] sm:$0xf]
        %v886 = vld [vmem:[%s872 + $0x34] sm:$0xf]
        %v887 = vld [vmem:[%s872 + $0x38] sm:$0xf]
        %v888 = vld [vmem:[%s872 + $0x3c] sm:$0xf]
        %s889 = scalar_lea.vmem %s2, 192
        %v890 = vld [vmem:[%s889] sm:$0xf]
        %v891 = vld [vmem:[%s889 + $0x4] sm:$0xf]
        %v892 = vld [vmem:[%s889 + $0x8] sm:$0xf]
        %v893 = vld [vmem:[%s889 + $0xc] sm:$0xf]
        %v894 = vld [vmem:[%s889 + $0x10] sm:$0xf]
        %v895 = vld [vmem:[%s889 + $0x14] sm:$0xf]
        %v896 = vld [vmem:[%s889 + $0x18] sm:$0xf]
        %v897 = vld [vmem:[%s889 + $0x1c] sm:$0xf]
        %v898 = vld [vmem:[%s889 + $0x20] sm:$0xf]
        %v899 = vld [vmem:[%s889 + $0x24] sm:$0xf]
        %v900 = vld [vmem:[%s889 + $0x28] sm:$0xf]
        %v901 = vld [vmem:[%s889 + $0x2c] sm:$0xf]
        %v902 = vld [vmem:[%s889 + $0x30] sm:$0xf]
        %v903 = vld [vmem:[%s889 + $0x34] sm:$0xf]
        %v904 = vld [vmem:[%s889 + $0x38] sm:$0xf]
        %v905 = vld [vmem:[%s889 + $0x3c] sm:$0xf]
        %v906 = vrot.slane %v729, 1
        %v924 = vunpack.c.l.b16 %v890
        %v925 = vunpack.c.l.b16 %v891
        %v926 = vunpack.c.l.b16 %v892
        %v927 = vunpack.c.l.b16 %v893
        %v928 = vunpack.c.l.b16 %v894
        %v929 = vunpack.c.l.b16 %v895
        %v930 = vunpack.c.l.b16 %v896
        %v931 = vunpack.c.l.b16 %v897
        %v932 = vunpack.c.l.b16 %v898
        %v933 = vunpack.c.l.b16 %v899
        %v934 = vunpack.c.l.b16 %v900
        %v935 = vunpack.c.l.b16 %v901
        %v936 = vunpack.c.l.b16 %v902
        %v937 = vunpack.c.l.b16 %v903
        %v938 = vunpack.c.l.b16 %v904
        %v939 = vunpack.c.l.b16 %v905
        %v940 = vpack.c.b16 %v925, %v924
        %v941 = vpack.c.b16 %v927, %v926
        %v942 = vpack.c.b16 %v929, %v928
        %v943 = vpack.c.b16 %v931, %v930
        %v944 = vpack.c.b16 %v933, %v932
        %v945 = vpack.c.b16 %v935, %v934
        %v946 = vpack.c.b16 %v937, %v936
        %v947 = vpack.c.b16 %v939, %v938
        %956 = vmatpush.bf16.msra.mxu0 %v947
        %957 = vmatpush.bf16.msra.mxu0 %v946
        %958 = vmatpush.bf16.msra.mxu0 %v945
        %959 = vmatpush.bf16.msra.mxu0 %v944
        %960 = vmatpush.bf16.msra.mxu0 %v943
        %961 = vmatpush.bf16.msra.mxu0 %v942
        %962 = vmatpush.bf16.msra.mxu0 %v941
        %963 = vmatpush.bf16.msra.mxu0 %v940
        %964 = vmatmul.bf16.gmra.mxu0 %v906
        %v965 = vpop.f32.mrf.mxu0
        %v966 = vadd.f32 0.0, %v965
        %v967 = vpop.f32.mrf.mxu0
        %968 = vdwg.mxu0
        %v985 = vunpack.c.l.b16 %v873
        %v986 = vunpack.c.l.b16 %v874
        %v987 = vunpack.c.l.b16 %v875
        %v988 = vunpack.c.l.b16 %v876
        %v989 = vunpack.c.l.b16 %v877
        %v990 = vunpack.c.l.b16 %v878
        %v991 = vunpack.c.l.b16 %v879
        %v992 = vunpack.c.l.b16 %v880
        %v993 = vunpack.c.l.b16 %v881
        %v994 = vunpack.c.l.b16 %v882
        %v995 = vunpack.c.l.b16 %v883
        %v996 = vunpack.c.l.b16 %v884
        %v997 = vunpack.c.l.b16 %v885
        %v998 = vunpack.c.l.b16 %v886
        %v999 = vunpack.c.l.b16 %v887
        %v1000 = vunpack.c.l.b16 %v888
        %v1001 = vpack.c.b16 %v986, %v985
        %v1002 = vpack.c.b16 %v988, %v987
        %v1003 = vpack.c.b16 %v990, %v989
        %v1004 = vpack.c.b16 %v992, %v991
        %v1005 = vpack.c.b16 %v994, %v993
        %v1006 = vpack.c.b16 %v996, %v995
        %v1007 = vpack.c.b16 %v998, %v997
        %v1008 = vpack.c.b16 %v1000, %v999
        %1017 = vmatpush.bf16.msra.mxu0 %v1008
        %1018 = vmatpush.bf16.msra.mxu0 %v1007
        %1019 = vmatpush.bf16.msra.mxu0 %v1006
        %1020 = vmatpush.bf16.msra.mxu0 %v1005
        %1021 = vmatpush.bf16.msra.mxu0 %v1004
        %1022 = vmatpush.bf16.msra.mxu0 %v1003
        %1023 = vmatpush.bf16.msra.mxu0 %v1002
        %1024 = vmatpush.bf16.msra.mxu0 %v1001
        %1025 = vmatmul.bf16.gmra.mxu0 %v736
        %v1026 = vpop.f32.mrf.mxu0
        %v1027 = vadd.f32 %v966, %v1026
        %v1028 = vpop.f32.mrf.mxu0
        %1029 = vdwg.mxu0
        %v1030 = vld [vmem:[%s5] sm:$0x1]
        %v1032 = vperm.slane %v1030, 0
        %v1034 = vmul.f32 %v1027, %v1032
        %v1035 = vld [vmem:[%s6] sm:$0x1]
        %v1037 = vperm.slane %v1035, 0
        %v1039 = vadd.f32 %v1034, %v1037
        %v1040 = vmax.f32 %v1039, 0.0
        %s1041 = scalar_lea.vmem %s291, 8 [#allocation2]
        %1042 = vst [vmem:[%s1041] sm:$0xff] %v1040
        %s1043 = sand.u32 %s194, 1
        %s1044 = sand.u32 %s194, 1
        %s1045 = smul.addr %s1044, 16
        %s1046 = scalar_lea.vmem [#allocation2], %s1045
        // Predicated region
        $region49: #{upblock_forward.1} parent=47 // pred_check
          %p1047 = pneg %p204
        $region50: #{upblock_forward.1} parent=47 // pred_check_branch
          %1049 = sbr.rel (%p1047) target = $region52
        $region51: #{upblock_forward.1} parent=47 // pred_region
          %s1050 = smul.addr %s22, 4
          %s1051 = sadd.s32 %s23, %s1050
          %s1052 = smul.addr %s1051, 8
          %s1053 = scalar_lea.vmem %s7, %s1052
          // Predicated region
          $region53: #{upblock_forward.1} parent=51 // pred_check
            _
          $region54: #{upblock_forward.1} parent=51 // pred_check_branch
            %1055 = sbr.rel (0) target = $region56
          $region55: #{upblock_forward.1} parent=51 // pred_region
            // Predicated region
            $region57: #{upblock_forward.1} parent=55 // pred_check
              _
            $region58: #{upblock_forward.1} parent=55 // pred_check_branch
              %1057 = sbr.rel (0) target = $region60
            $region59: #{upblock_forward.1} parent=55 // pred_region
              // Predicated region
              $region72: #{upblock_forward.1} parent=59 // pred_check
                _
              $region73: #{upblock_forward.1} parent=59 // pred_check_branch
                %1075 = sbr.rel (0) target = $region75
              $region74: #{upblock_forward.1} parent=59 // pred_region
                loop: start=0, step=1, limit=1
                $region76: #{upblock_forward.1} parent=74 // loop_pre_header
                  _
                $region77: #{upblock_forward.1} parent=74 // loop_header
                  %s1077 = sphi 0, %s1081
                  %p1078 = scmp.ge.s32.totalorder %s1077, 1
                  %s1082 = sphi %s1046, %s1046
                  %s1083 = sphi %s1053, %s1053
                $region78: #{upblock_forward.1} parent=74 // loop_header_branch
                  %1080 = sbr.rel (%p1078) target = $region82
                $region79: #{upblock_forward.1} parent=74 // loop_body
                  %v1084 = vld [vmem:[%s1082] sm:$0xff]
                  %1085 = vst [vmem:[%s1083] sm:$0xff] %v1084
                  %v1086 = vld [vmem:[%s1082 + $0x8] sm:$0xff]
                  %1087 = vst [vmem:[%s1083 + $0x10] sm:$0xff] %v1086
                $region80: #{upblock_forward.1} parent=74 // loop_footer
                  %s1081 = sadd.s32 1, %s1077
                $region81: #{upblock_forward.1} parent=74 // loop_footer_branch
                  %1076 = sbr.rel target = $region77
                $region82: #{upblock_forward.1} parent=74 // loop_exit
                  _
              $region75: #{upblock_forward.1} parent=59 // pred_fallthru
                _
              // Predicated region
              $region83: #{upblock_forward.1} parent=59 // pred_check
                _
              $region84: #{upblock_forward.1} parent=59 // pred_check_branch
                %1089 = sbr.rel target = $region86
              $region85: #{upblock_forward.1} parent=59 // pred_region
                _
              $region86: #{upblock_forward.1} parent=59 // pred_fallthru
                _
            $region60: #{upblock_forward.1} parent=55 // pred_fallthru
              _
            // Predicated region
            $region61: #{upblock_forward.1} parent=55 // pred_check
              _
            $region62: #{upblock_forward.1} parent=55 // pred_check_branch
              %1059 = sbr.rel target = $region64
            $region63: #{upblock_forward.1} parent=55 // pred_region
              %s1061 = ssub.s32 256, 1
              loop: start=0, step=1, limit=1
              $region65: #{upblock_forward.1} parent=63 // loop_pre_header
                _
              $region66: #{upblock_forward.1} parent=63 // loop_header
                %s1063 = sphi 0, %s1067
                %p1064 = scmp.ge.s32.totalorder %s1063, 1
                %s1068 = sphi %s1046, %s1046
                %s1069 = sphi %s1053, %s1053
              $region67: #{upblock_forward.1} parent=63 // loop_header_branch
                %1066 = sbr.rel (%p1064) target = $region71
              $region68: #{upblock_forward.1} parent=63 // loop_body
                %v1070 = vld [vmem:[%s1068] sm:%s1061]
                %1071 = vst [vmem:[%s1069] sm:%s1061] %v1070
                %v1072 = vld [vmem:[%s1068 + $0x8] sm:%s1061]
                %1073 = vst [vmem:[%s1069 + $0x10] sm:%s1061] %v1072
              $region69: #{upblock_forward.1} parent=63 // loop_footer
                %s1067 = sadd.s32 1, %s1063
              $region70: #{upblock_forward.1} parent=63 // loop_footer_branch
                %1062 = sbr.rel target = $region66
              $region71: #{upblock_forward.1} parent=63 // loop_exit
                _
            $region64: #{upblock_forward.1} parent=55 // pred_fallthru
              _
          $region56: #{upblock_forward.1} parent=51 // pred_fallthru
            _
          %1090 = vnop
        $region52: #{upblock_forward.1} parent=47 // pred_fallthru
          _
      $region48: #{upblock_forward.1} parent=5 // pred_fallthru
        _
      %p1091 = scmp.le.s32.totalorder 2, %s13
      // Predicated region
      $region87: #{upblock_forward.1} parent=5 // pred_check
        %p1092 = pneg %p1091
      $region88: #{upblock_forward.1} parent=5 // pred_check_branch
        %1094 = sbr.rel (%p1092) target = $region90
      $region89: #{upblock_forward.1} parent=5 // pred_region
        %s1095 = ssub.s32 %s13, 2
        // Predicated region
        $region91: #{upblock_forward.1} parent=89 // pred_check
          %p1096 = pneg %p210
        $region92: #{upblock_forward.1} parent=89 // pred_check_branch
          %1098 = sbr.rel (%p1096) target = $region94
        $region93: #{upblock_forward.1} parent=89 // pred_region
          %s1099 = sand.u32 %s195, 1
          %s1100 = sand.u32 %s195, 1
          %s1101 = smul.addr %s1100, 16
          %s1102 = scalar_lea.vmem [#allocation2], %s1101
        $region94: #{upblock_forward.1} parent=89 // pred_fallthru
          _
      $region90: #{upblock_forward.1} parent=5 // pred_fallthru
        _
    $region6: #{upblock_forward.1} parent=1 // loop_footer
      %s17 = sadd.s32 1, %s13
    $region7: #{upblock_forward.1} parent=1 // loop_footer_branch
      %12 = sbr.rel target = $region3
    $region8: #{upblock_forward.1} parent=1 // loop_exit
      _

</llo_original>
